<compile_context>
chip_gen: v6e
topology: v6e:2x2x1
jax: 0.10.0
libtpu: 0.0.40
codegen_flags: <defaults>
</compile_context>

<pallas_src>
import math

import jax
import jax.numpy as jnp
from jax.experimental import pallas as pl
from jax.experimental.pallas import tpu as pltpu


def _mha_body(q_ref, k_ref, v_ref,
              wq_ref, bq_ref, wk_ref, bk_ref, wv_ref, bv_ref,
              wo_ref, bo_ref, gamma_ref, beta_ref,
              out_ref, attn_ref, k_scr, v_scr, *, head_num):
    """One (batch, q-tile) grid step.

    Block shapes inside the kernel:
      q_ref              : (1, tq, D) f32
      k_ref / v_ref      : (1, N,  D) f32   (full key/value sequence)
      w*_ref             : (D, D)  matmul dtype (pre-cast in the wrapper)
      b*_ref, gamma, beta: (1, D)  f32
      out_ref            : (1, tq, D)
      attn_ref           : (1, H, tq, N) or None
      k_scr / v_scr      : (N, D)  matmul-dtype VMEM scratch (cached K/V proj)
    """
    H = head_num
    tq, D = out_ref.shape[1], out_ref.shape[2]
    N = k_scr.shape[0]
    dk = D // H
    scale = 1.0 / math.sqrt(dk)
    mdt = k_scr.dtype

    xq = q_ref[0]                                   # (tq, D) f32 — residual

    # K/V projections: computed once per batch (first q-tile of the inner,
    # "arbitrary" grid axis) and cached in persistent VMEM scratch, already in
    # the matmul dtype.  All subsequent q-tiles of this batch reuse them.
    @pl.when(pl.program_id(1) == 0)
    def _():
        k_scr[...] = (jnp.dot(k_ref[0].astype(mdt), wk_ref[...],
                              preferred_element_type=jnp.float32)
                      + bk_ref[...]).astype(mdt)
        v_scr[...] = (jnp.dot(v_ref[0].astype(mdt), wv_ref[...],
                              preferred_element_type=jnp.float32)
                      + bv_ref[...]).astype(mdt)

    # Q projection (per q-tile) with the 1/sqrt(d_k) softmax scale folded in
    # once (tq*D muls hidden under MXU latency instead of scaling every score).
    q = jnp.dot(xq.astype(mdt), wq_ref[...],
                preferred_element_type=jnp.float32) + bq_ref[...]
    q = (q * scale).astype(mdt)

    # Head split: (tq, D) -> (H, tq, dk), (N, D) -> (H, N, dk).
    qh = q.reshape(tq, H, dk).transpose(1, 0, 2)
    kh = k_scr[...].reshape(N, H, dk).transpose(1, 0, 2)
    vh = v_scr[...].reshape(N, H, dk).transpose(1, 0, 2)

    # Head-batched scores: single MXU dot_general over all heads -> (H, tq, N).
    s = jax.lax.dot_general(
        qh, kh, dimension_numbers=(((2,), (2,)), ((0,), (0,))),
        preferred_element_type=jnp.float32)

    # Numerically-stable softmax over keys, kept in f32; EUP reciprocal.
    s = s - jnp.max(s, axis=-1, keepdims=True)
    e = jnp.exp(s)
    p = e * pl.reciprocal(jnp.sum(e, axis=-1, keepdims=True), approx=True)

    if attn_ref is not None:
        attn_ref[0] = p.astype(attn_ref.dtype)
    # TODO(synk): nn.Dropout(p=0.1) on the probs omitted (eval-mode identity).

    # Head-batched P @ V: (H, tq, N) x (H, N, dk) -> (H, tq, dk).
    ctx = jax.lax.dot_general(
        p.astype(mdt), vh, dimension_numbers=(((2,), (1,)), ((0,), (0,))),
        preferred_element_type=jnp.float32)

    # Merge heads back into a lane-dense (tq, D) slab, then ONE full-width
    # (K = D) output projection — no per-head lane-sliced scratch stores.
    concat = ctx.transpose(1, 0, 2).reshape(tq, D).astype(mdt)
    y = jnp.dot(concat, wo_ref[...],
                preferred_element_type=jnp.float32) + bo_ref[...]

    # Residual add + LayerNorm (eps=1e-5, biased variance — torch defaults).
    y = y + xq
    mean = jnp.mean(y, axis=-1, keepdims=True)
    var = jnp.mean((y - mean) ** 2, axis=-1, keepdims=True)
    yn = (y - mean) * jax.lax.rsqrt(var + 1e-5)
    out_ref[0] = (yn * gamma_ref[...] + beta_ref[...]).astype(out_ref.dtype)


def _make_kernel(head_num, with_attn):
    def kernel(q_ref, k_ref, v_ref, wq_ref, bq_ref, wk_ref, bk_ref,
               wv_ref, bv_ref, wo_ref, bo_ref, gamma_ref, beta_ref,
               out_ref, *rest):
        if with_attn:
            attn_ref, k_scr, v_scr = rest
        else:
            attn_ref = None
            k_scr, v_scr = rest
        _mha_body(q_ref, k_ref, v_ref, wq_ref, bq_ref, wk_ref, bk_ref,
                  wv_ref, bv_ref, wo_ref, bo_ref, gamma_ref, beta_ref,
                  out_ref, attn_ref, k_scr, v_scr, head_num=head_num)
    return kernel


def multi_headed_attention(q, k, v, params, head_num, *, q_tile=None,
                           matmul_dtype=jnp.bfloat16, return_attn=True,
                           attn_dtype=None):
    """Pallas forward of MultiHeadedAttention.  Returns (out, attn) or out."""
    B, N, D = q.shape
    assert D % head_num == 0
    wq, bq, wk, bk, wv, bv, wo, bo, gamma, beta = params

    mdt = jnp.dtype(matmul_dtype)
    attn_dt = mdt if attn_dtype is None else jnp.dtype(attn_dtype)

    # Cast weight matrices to the MXU operand dtype ONCE at the HBM boundary.
    wq, wk, wv, wo = (w.astype(mdt) for w in (wq, wk, wv, wo))

    # q_tile policy: fill the MXU (256 rows) for long sequences, whole sequence
    # for short ones.  Block (q_tile, D): q_tile must be a multiple of 8 or the
    # full sequence (D is always the full dim).
    if q_tile is None:
        q_tile = 256 if (N > 256 and N % 256 == 0) else N
    assert N % q_tile == 0
    assert q_tile == N or q_tile % 8 == 0, "q_tile must be a multiple of 8"
    n_qt = N // q_tile

    q_spec = pl.BlockSpec((1, q_tile, D), lambda b, t: (b, t, 0))
    # Constant index across the q-tile axis -> fetched once per batch.
    kv_spec = pl.BlockSpec((1, N, D), lambda b, t: (b, 0, 0))
    # Constant-index weight blocks: fetched once, resident across the grid.
    w_spec = pl.BlockSpec((D, D), lambda b, t: (0, 0))
    vec_spec = pl.BlockSpec((1, D), lambda b, t: (0, 0))

    out_specs = [pl.BlockSpec((1, q_tile, D), lambda b, t: (b, t, 0))]
    out_shape = [jax.ShapeDtypeStruct((B, N, D), jnp.float32)]
    if return_attn:
        out_specs.append(
            pl.BlockSpec((1, head_num, q_tile, N), lambda b, t: (b, 0, t, 0)))
        out_shape.append(
            jax.ShapeDtypeStruct((B, head_num, N, N), attn_dt))

    # VMEM budget from the actual (double-buffered) block footprint, capped by
    # the device's physical VMEM (with headroom) but never below the footprint.
    f32b, mdtb, attnb = 4, mdt.itemsize, attn_dt.itemsize
    blk_bytes = (
        2 * q_tile * D * f32b            # q blocks
        + 2 * 2 * N * D * f32b           # k, v input blocks
        + 2 * 4 * D * D * mdtb           # weight blocks (matmul dtype)
        + 2 * 6 * D * f32b               # biases / LN params
        + 2 * q_tile * D * f32b          # out blocks
        + 2 * N * D * mdtb)              # K/V projection scratch
    if return_attn:
        blk_bytes += 2 * head_num * q_tile * N * attnb
    try:
        vmem_cap = int(pltpu.get_tpu_info().vmem_capacity_bytes)
    except Exception:
        vmem_cap = 64 * 1024 * 1024      # conservative (v7x per-TC) fallback
    vmem_limit = int(min(max(blk_bytes + (8 << 20), 32 << 20),
                         int(vmem_cap * 0.85)))
    vmem_limit = max(vmem_limit, blk_bytes + (2 << 20))

    grid_spec = pltpu.PrefetchScalarGridSpec(
        num_scalar_prefetch=0,
        grid=(B, n_qt),
        in_specs=[q_spec, kv_spec, kv_spec,
                  w_spec, vec_spec,       # wq, bq
                  w_spec, vec_spec,       # wk, bk
                  w_spec, vec_spec,       # wv, bv
                  w_spec, vec_spec,       # wo, bo
                  vec_spec, vec_spec],    # gamma, beta
        out_specs=out_specs,
        scratch_shapes=[pltpu.VMEM((N, D), mdt),   # cached K projection
                        pltpu.VMEM((N, D), mdt)],  # cached V projection
    )

    fn = pl.pallas_call(
        _make_kernel(head_num, return_attn),
        grid_spec=grid_spec,
        out_shape=tuple(out_shape),
        compiler_params=pltpu.CompilerParams(
            # Batch axis parallel (shards across TCs on v7x); q-tile axis is
            # "arbitrary" because it carries the K/V scratch dependence.
            dimension_semantics=("parallel", "arbitrary"),
            vmem_limit_bytes=vmem_limit),
    )
    outs = fn(q, k, v, wq, bq, wk, bk, wv, bv, wo, bo, gamma, beta)
    if return_attn:
        return outs[0], outs[1]
    return outs[0]


def ref_forward(q, k, v, params, H):
    """Plain-JAX reference mirroring the PyTorch forward (dropout in eval mode)."""
    wq, bq, wk, bk, wv, bv, wo, bo, gamma, beta = params
    B, N, D = q.shape
    dk = D // H

    def split(x):
        return x.reshape(B, N, H, dk).transpose(0, 2, 1, 3)

    Q = split(q @ wq + bq)
    K = split(k @ wk + bk)
    V = split(v @ wv + bv)
    s = jnp.einsum('bhnd,bhmd->bhnm', Q, K) / math.sqrt(dk)
    p = jax.nn.softmax(s, axis=-1)
    vec = jnp.einsum('bhnm,bhmd->bhnd', p, V)
    concat = vec.transpose(0, 2, 1, 3).reshape(B, N, D)
    y = concat @ wo + bo + q
    mean = y.mean(-1, keepdims=True)
    var = ((y - mean) ** 2).mean(-1, keepdims=True)
    yn = (y - mean) / jnp.sqrt(var + 1e-5)
    return yn * gamma + beta, p


if __name__ == "__main__":
    B, N, H, D = 2, 8, 4, 32      # batch, seq, heads, d_model (d_k = 8)
    key = jax.random.PRNGKey(0)
    ks = jax.random.split(key, 16)

    bound = 1.0 / math.sqrt(D)    # nn.Linear-style uniform init

    def u(k_, shape):
        return jax.random.uniform(k_, shape, jnp.float32, -bound, bound)

    # Weights stored transposed: y = x @ W + b.
    wq, bq = u(ks[0], (D, D)), u(ks[1], (1, D))
    wk, bk = u(ks[2], (D, D)), u(ks[3], (1, D))
    wv, bv = u(ks[4], (D, D)), u(ks[5], (1, D))
    wo, bo = u(ks[6], (D, D)), u(ks[7], (1, D))
    gamma = jnp.ones((1, D), jnp.float32)
    beta = jnp.zeros((1, D), jnp.float32)
    params = (wq, bq, wk, bk, wv, bv, wo, bo, gamma, beta)

    q = jax.random.normal(ks[8], (B, N, D), jnp.float32)
    k = jax.random.normal(ks[9], (B, N, D), jnp.float32)
    v = jax.random.normal(ks[10], (B, N, D), jnp.float32)

    out_ref_, attn_ref_ = ref_forward(q, k, v, params, H)

    # 1) Default path: bf16 MXU operands + bf16 weights/attn-probs at the HBM
    #    boundary (f32 accumulation, f32 softmax/LayerNorm).
    out_bf, attn_bf = multi_headed_attention(q, k, v, params, H)
    out_bf = jax.block_until_ready(out_bf)
    assert out_bf.shape == (B, N, D) and attn_bf.shape == (B, H, N, N)
    assert jnp.allclose(out_bf, out_ref_, atol=8e-2, rtol=8e-2)
    assert jnp.allclose(attn_bf.astype(jnp.float32), attn_ref_,
                        atol=5e-2, rtol=5e-2)

    # 2) f32 MXU path: tighter numerical check of the kernel math.
    out_f32, attn_f32 = multi_headed_attention(q, k, v, params, H,
                                               matmul_dtype=jnp.float32)
    out_f32 = jax.block_until_ready(out_f32)
    assert jnp.allclose(out_f32, out_ref_, atol=1e-2, rtol=1e-2)
    assert jnp.allclose(attn_f32, attn_ref_, atol=1e-2, rtol=1e-2)

    # 3) out-only fast path (drops the (B, H, N, N) HBM writeback entirely).
    out_only = multi_headed_attention(q, k, v, params, H,
                                      matmul_dtype=jnp.float32,
                                      return_attn=False)
    out_only = jax.block_until_ready(out_only)
    assert out_only.shape == (B, N, D)
    assert jnp.allclose(out_only, out_ref_, atol=1e-2, rtol=1e-2)

    # 4) q-tiled grid (N=16, q_tile=8): exercises the K/V-projection caching
    #    across q-tiles (inner "arbitrary" axis + persistent VMEM scratch).
    N2 = 16
    q2 = jax.random.normal(ks[11], (B, N2, D), jnp.float32)
    k2 = jax.random.normal(ks[12], (B, N2, D), jnp.float32)
    v2 = jax.random.normal(ks[13], (B, N2, D), jnp.float32)
    out2, attn2 = multi_headed_attention(q2, k2, v2, params, H,
                                         matmul_dtype=jnp.float32, q_tile=8)
    out2 = jax.block_until_ready(out2)
    out2_ref, attn2_ref = ref_forward(q2, k2, v2, params, H)
    assert out2.shape == (B, N2, D) and attn2.shape == (B, H, N2, N2)
    assert jnp.allclose(out2, out2_ref, atol=1e-2, rtol=1e-2)
    assert jnp.allclose(attn2, attn2_ref, atol=1e-2, rtol=1e-2)

    print("KERNEL_OK")
</pallas_src>

<mosaic_0001>
module attributes {stable_mosaic.version = 11 : i64} {
  func.func @kernel(%arg0: i32, %arg1: i32, %arg2: memref<1x8x32xf32, #tpu.memory_space<vmem>>, %arg3: memref<1x8x32xf32, #tpu.memory_space<vmem>>, %arg4: memref<1x8x32xf32, #tpu.memory_space<vmem>>, %arg5: memref<32x32xbf16, #tpu.memory_space<vmem>>, %arg6: memref<1x32xf32, #tpu.memory_space<vmem>>, %arg7: memref<32x32xbf16, #tpu.memory_space<vmem>>, %arg8: memref<1x32xf32, #tpu.memory_space<vmem>>, %arg9: memref<32x32xbf16, #tpu.memory_space<vmem>>, %arg10: memref<1x32xf32, #tpu.memory_space<vmem>>, %arg11: memref<32x32xbf16, #tpu.memory_space<vmem>>, %arg12: memref<1x32xf32, #tpu.memory_space<vmem>>, %arg13: memref<1x32xf32, #tpu.memory_space<vmem>>, %arg14: memref<1x32xf32, #tpu.memory_space<vmem>>, %arg15: memref<1x8x32xf32, #tpu.memory_space<vmem>>, %arg16: memref<1x4x8x8xbf16, #tpu.memory_space<vmem>>, %arg17: memref<8x32xbf16, #tpu.memory_space<vmem>>, %arg18: memref<8x32xbf16, #tpu.memory_space<vmem>>) attributes {dimension_semantics = [#tpu.dimension_semantics<parallel>, #tpu.dimension_semantics<arbitrary>], iteration_bounds = array<i64: 2, 1>, scalar_prefetch = 0 : i64, scratch_operands = 2 : i64, tpu.core_type = #tpu.core_type<tc>, window_params = [{transform_indices = @transform_0, window_bounds = array<i64: 1, 8, 32>}, {transform_indices = @transform_1, window_bounds = array<i64: 1, 8, 32>}, {transform_indices = @transform_2, window_bounds = array<i64: 1, 8, 32>}, {pipeline_mode = #tpu.pipeline_mode<synchronous>, transform_indices = @transform_3, window_bounds = array<i64: 32, 32>}, {pipeline_mode = #tpu.pipeline_mode<synchronous>, transform_indices = @transform_4, window_bounds = array<i64: 1, 32>}, {pipeline_mode = #tpu.pipeline_mode<synchronous>, transform_indices = @transform_5, window_bounds = array<i64: 32, 32>}, {pipeline_mode = #tpu.pipeline_mode<synchronous>, transform_indices = @transform_6, window_bounds = array<i64: 1, 32>}, {pipeline_mode = #tpu.pipeline_mode<synchronous>, transform_indices = @transform_7, window_bounds = array<i64: 32, 32>}, {pipeline_mode = #tpu.pipeline_mode<synchronous>, transform_indices = @transform_8, window_bounds = array<i64: 1, 32>}, {pipeline_mode = #tpu.pipeline_mode<synchronous>, transform_indices = @transform_9, window_bounds = array<i64: 32, 32>}, {pipeline_mode = #tpu.pipeline_mode<synchronous>, transform_indices = @transform_10, window_bounds = array<i64: 1, 32>}, {pipeline_mode = #tpu.pipeline_mode<synchronous>, transform_indices = @transform_11, window_bounds = array<i64: 1, 32>}, {pipeline_mode = #tpu.pipeline_mode<synchronous>, transform_indices = @transform_12, window_bounds = array<i64: 1, 32>}, {transform_indices = @transform_13, window_bounds = array<i64: 1, 8, 32>}, {transform_indices = @transform_14, window_bounds = array<i64: 1, 4, 8, 8>}]} {
    %c0 = arith.constant 0 : index
    %c0_0 = arith.constant 0 : index
    %c0_1 = arith.constant 0 : index
    %0 = vector.load %arg2[%c0, %c0_0, %c0_1] : memref<1x8x32xf32, #tpu.memory_space<vmem>>, vector<1x8x32xf32>
    %1 = vector.shape_cast %0 : vector<1x8x32xf32> to vector<8x32xf32>
    %c0_i32 = arith.constant 0 : i32
    %2 = arith.cmpi eq, %arg1, %c0_i32 : i32
    %3 = arith.extui %2 : i1 to i32
    %c0_i32_2 = arith.constant 0 : i32
    %4 = arith.cmpi ne, %3, %c0_i32_2 : i32
    scf.if %4 {
      %c0_37 = arith.constant 0 : index
      %c0_38 = arith.constant 0 : index
      %c0_39 = arith.constant 0 : index
      %75 = vector.load %arg3[%c0_37, %c0_38, %c0_39] : memref<1x8x32xf32, #tpu.memory_space<vmem>>, vector<1x8x32xf32>
      %76 = vector.shape_cast %75 : vector<1x8x32xf32> to vector<8x32xf32>
      %77 = arith.truncf %76 : vector<8x32xf32> to vector<8x32xbf16>
      %c0_40 = arith.constant 0 : index
      %c0_41 = arith.constant 0 : index
      %78 = vector.load %arg7[%c0_40, %c0_41] : memref<32x32xbf16, #tpu.memory_space<vmem>>, vector<32x32xbf16>
      %cst_42 = arith.constant dense<0.000000e+00> : vector<8x32xf32>
      %79 = tpu.matmul %77, %78, %cst_42 {dimension_numbers = #tpu.dot_dimension_numbers<[1], [0], [0], [1], [0, 0, 1, 1], [], []>} : vector<8x32xbf16>, vector<32x32xbf16>, vector<8x32xf32> -> vector<8x32xf32>
      %c0_43 = arith.constant 0 : index
      %c0_44 = arith.constant 0 : index
      %80 = vector.load %arg8[%c0_43, %c0_44] : memref<1x32xf32, #tpu.memory_space<vmem>>, vector<1x32xf32>
      %81 = vector.broadcast %80 : vector<1x32xf32> to vector<8x32xf32>
      %82 = arith.addf %79, %81 : vector<8x32xf32>
      %83 = arith.truncf %82 : vector<8x32xf32> to vector<8x32xbf16>
      %c0_45 = arith.constant 0 : index
      %c0_46 = arith.constant 0 : index
      %84 = vector.load %arg17[%c0_45, %c0_46] : memref<8x32xbf16, #tpu.memory_space<vmem>>, vector<8x32xbf16>
      tpu.vector_store %arg17[%c0_45, %c0_46], %83 {strides = array<i32>} : memref<8x32xbf16, #tpu.memory_space<vmem>>, vector<8x32xbf16>,
      %c0_47 = arith.constant 0 : index
      %c0_48 = arith.constant 0 : index
      %c0_49 = arith.constant 0 : index
      %85 = vector.load %arg4[%c0_47, %c0_48, %c0_49] : memref<1x8x32xf32, #tpu.memory_space<vmem>>, vector<1x8x32xf32>
      %86 = vector.shape_cast %85 : vector<1x8x32xf32> to vector<8x32xf32>
      %87 = arith.truncf %86 : vector<8x32xf32> to vector<8x32xbf16>
      %c0_50 = arith.constant 0 : index
      %c0_51 = arith.constant 0 : index
      %88 = vector.load %arg9[%c0_50, %c0_51] : memref<32x32xbf16, #tpu.memory_space<vmem>>, vector<32x32xbf16>
      %cst_52 = arith.constant dense<0.000000e+00> : vector<8x32xf32>
      %89 = tpu.matmul %87, %88, %cst_52 {dimension_numbers = #tpu.dot_dimension_numbers<[1], [0], [0], [1], [0, 0, 1, 1], [], []>} : vector<8x32xbf16>, vector<32x32xbf16>, vector<8x32xf32> -> vector<8x32xf32>
      %c0_53 = arith.constant 0 : index
      %c0_54 = arith.constant 0 : index
      %90 = vector.load %arg10[%c0_53, %c0_54] : memref<1x32xf32, #tpu.memory_space<vmem>>, vector<1x32xf32>
      %91 = vector.broadcast %90 : vector<1x32xf32> to vector<8x32xf32>
      %92 = arith.addf %89, %91 : vector<8x32xf32>
      %93 = arith.truncf %92 : vector<8x32xf32> to vector<8x32xbf16>
      %c0_55 = arith.constant 0 : index
      %c0_56 = arith.constant 0 : index
      %94 = vector.load %arg18[%c0_55, %c0_56] : memref<8x32xbf16, #tpu.memory_space<vmem>>, vector<8x32xbf16>
      tpu.vector_store %arg18[%c0_55, %c0_56], %93 {strides = array<i32>} : memref<8x32xbf16, #tpu.memory_space<vmem>>, vector<8x32xbf16>,
    } else {
    }
    %5 = arith.truncf %1 : vector<8x32xf32> to vector<8x32xbf16>
    %c0_3 = arith.constant 0 : index
    %c0_4 = arith.constant 0 : index
    %6 = vector.load %arg5[%c0_3, %c0_4] : memref<32x32xbf16, #tpu.memory_space<vmem>>, vector<32x32xbf16>
    %cst = arith.constant dense<0.000000e+00> : vector<8x32xf32>
    %7 = tpu.matmul %5, %6, %cst {dimension_numbers = #tpu.dot_dimension_numbers<[1], [0], [0], [1], [0, 0, 1, 1], [], []>} : vector<8x32xbf16>, vector<32x32xbf16>, vector<8x32xf32> -> vector<8x32xf32>
    %c0_5 = arith.constant 0 : index
    %c0_6 = arith.constant 0 : index
    %8 = vector.load %arg6[%c0_5, %c0_6] : memref<1x32xf32, #tpu.memory_space<vmem>>, vector<1x32xf32>
    %9 = vector.broadcast %8 : vector<1x32xf32> to vector<8x32xf32>
    %10 = arith.addf %7, %9 : vector<8x32xf32>
    %cst_7 = arith.constant 0.353553385 : f32
    %11 = vector.broadcast %cst_7 : f32 to vector<8x32xf32>
    %12 = arith.mulf %10, %11 : vector<8x32xf32>
    %13 = arith.truncf %12 : vector<8x32xf32> to vector<8x32xbf16>
    %14 = vector.shape_cast %13 : vector<8x32xbf16> to vector<8x4x8xbf16>
    %15 = tpu.transpose %14, [1, 0, 2] : vector<8x4x8xbf16> -> vector<4x8x8xbf16>
    %c0_8 = arith.constant 0 : index
    %c0_9 = arith.constant 0 : index
    %16 = vector.load %arg17[%c0_8, %c0_9] : memref<8x32xbf16, #tpu.memory_space<vmem>>, vector<8x32xbf16>
    %17 = vector.shape_cast %16 : vector<8x32xbf16> to vector<8x4x8xbf16>
    %18 = tpu.transpose %17, [1, 0, 2] : vector<8x4x8xbf16> -> vector<4x8x8xbf16>
    %c0_10 = arith.constant 0 : index
    %c0_11 = arith.constant 0 : index
    %19 = vector.load %arg18[%c0_10, %c0_11] : memref<8x32xbf16, #tpu.memory_space<vmem>>, vector<8x32xbf16>
    %20 = vector.shape_cast %19 : vector<8x32xbf16> to vector<8x4x8xbf16>
    %21 = tpu.transpose %20, [1, 0, 2] : vector<8x4x8xbf16> -> vector<4x8x8xbf16>
    %cst_12 = arith.constant dense<0.000000e+00> : vector<4x8x8xf32>
    %22 = tpu.matmul %15, %18, %cst_12 {dimension_numbers = #tpu.dot_dimension_numbers<[2], [2], [1], [1], [0, 0, 0, 1, 1, 1], [0], [0]>} : vector<4x8x8xbf16>, vector<4x8x8xbf16>, vector<4x8x8xf32> -> vector<4x8x8xf32>
    %cst_13 = arith.constant dense<0xFF800000> : vector<4x8xf32>
    %23 = vector.multi_reduction <maximumf>, %22, %cst_13 [2] : vector<4x8x8xf32> to vector<4x8xf32>
    %24 = vector.shape_cast %23 : vector<4x8xf32> to vector<4x8x1xf32>
    %25 = vector.broadcast %24 : vector<4x8x1xf32> to vector<4x8x8xf32>
    %26 = arith.subf %22, %25 : vector<4x8x8xf32>
    %27 = math.exp %26 : vector<4x8x8xf32>
    %cst_14 = arith.constant dense<0.000000e+00> : vector<4x8xf32>
    %28 = vector.multi_reduction <add>, %27, %cst_14 [2] : vector<4x8x8xf32> to vector<4x8xf32>
    %29 = vector.shape_cast %28 : vector<4x8xf32> to vector<4x8x1xf32>
    %30 = tpu.reciprocal %29 {approx = true} : vector<4x8x1xf32> -> vector<4x8x1xf32>
    %31 = vector.broadcast %30 : vector<4x8x1xf32> to vector<4x8x8xf32>
    %32 = arith.mulf %27, %31 : vector<4x8x8xf32>
    %33 = arith.truncf %32 : vector<4x8x8xf32> to vector<4x8x8xbf16>
    %c0_15 = arith.constant 0 : index
    %c0_16 = arith.constant 0 : index
    %c0_17 = arith.constant 0 : index
    %c0_18 = arith.constant 0 : index
    %34 = vector.load %arg16[%c0_15, %c0_16, %c0_17, %c0_18] : memref<1x4x8x8xbf16, #tpu.memory_space<vmem>>, vector<1x4x8x8xbf16>
    %35 = vector.shape_cast %34 : vector<1x4x8x8xbf16> to vector<4x8x8xbf16>
    %36 = vector.shape_cast %33 : vector<4x8x8xbf16> to vector<1x4x8x8xbf16>
    tpu.vector_store %arg16[%c0_15, %c0_16, %c0_17, %c0_18], %36 {strides = array<i32>} : memref<1x4x8x8xbf16, #tpu.memory_space<vmem>>, vector<1x4x8x8xbf16>,
    %37 = arith.truncf %32 : vector<4x8x8xf32> to vector<4x8x8xbf16>
    %cst_19 = arith.constant dense<0.000000e+00> : vector<4x8x8xf32>
    %38 = tpu.matmul %37, %21, %cst_19 {dimension_numbers = #tpu.dot_dimension_numbers<[2], [1], [1], [2], [0, 0, 0, 1, 1, 2], [0], [0]>} : vector<4x8x8xbf16>, vector<4x8x8xbf16>, vector<4x8x8xf32> -> vector<4x8x8xf32>
    %39 = tpu.transpose %38, [1, 0, 2] : vector<4x8x8xf32> -> vector<8x4x8xf32>
    %40 = vector.shape_cast %39 : vector<8x4x8xf32> to vector<8x32xf32>
    %41 = arith.truncf %40 : vector<8x32xf32> to vector<8x32xbf16>
    %c0_20 = arith.constant 0 : index
    %c0_21 = arith.constant 0 : index
    %42 = vector.load %arg11[%c0_20, %c0_21] : memref<32x32xbf16, #tpu.memory_space<vmem>>, vector<32x32xbf16>
    %cst_22 = arith.constant dense<0.000000e+00> : vector<8x32xf32>
    %43 = tpu.matmul %41, %42, %cst_22 {dimension_numbers = #tpu.dot_dimension_numbers<[1], [0], [0], [1], [0, 0, 1, 1], [], []>} : vector<8x32xbf16>, vector<32x32xbf16>, vector<8x32xf32> -> vector<8x32xf32>
    %c0_23 = arith.constant 0 : index
    %c0_24 = arith.constant 0 : index
    %44 = vector.load %arg12[%c0_23, %c0_24] : memref<1x32xf32, #tpu.memory_space<vmem>>, vector<1x32xf32>
    %45 = vector.broadcast %44 : vector<1x32xf32> to vector<8x32xf32>
    %46 = arith.addf %43, %45 : vector<8x32xf32>
    %47 = arith.addf %46, %1 : vector<8x32xf32>
    %cst_25 = arith.constant dense<0.000000e+00> : vector<8xf32>
    %48 = vector.multi_reduction <add>, %47, %cst_25 [1] : vector<8x32xf32> to vector<8xf32>
    %49 = vector.shape_cast %48 : vector<8xf32> to vector<8x1xf32>
    %cst_26 = arith.constant 3.200000e+01 : f32
    %50 = vector.broadcast %cst_26 : f32 to vector<8x1xf32>
    %51 = arith.divf %49, %50 : vector<8x1xf32>
    %52 = vector.broadcast %51 : vector<8x1xf32> to vector<8x32xf32>
    %53 = arith.subf %47, %52 : vector<8x32xf32>
    %54 = arith.mulf %53, %53 : vector<8x32xf32>
    %cst_27 = arith.constant dense<0.000000e+00> : vector<8xf32>
    %55 = vector.multi_reduction <add>, %54, %cst_27 [1] : vector<8x32xf32> to vector<8xf32>
    %56 = vector.shape_cast %55 : vector<8xf32> to vector<8x1xf32>
    %cst_28 = arith.constant 3.200000e+01 : f32
    %57 = vector.broadcast %cst_28 : f32 to vector<8x1xf32>
    %58 = arith.divf %56, %57 : vector<8x1xf32>
    %59 = vector.broadcast %51 : vector<8x1xf32> to vector<8x32xf32>
    %60 = arith.subf %47, %59 : vector<8x32xf32>
    %cst_29 = arith.constant 9.99999974E-6 : f32
    %61 = vector.broadcast %cst_29 : f32 to vector<8x1xf32>
    %62 = arith.addf %58, %61 : vector<8x1xf32>
    %63 = math.rsqrt %62 : vector<8x1xf32>
    %64 = vector.broadcast %63 : vector<8x1xf32> to vector<8x32xf32>
    %65 = arith.mulf %60, %64 : vector<8x32xf32>
    %c0_30 = arith.constant 0 : index
    %c0_31 = arith.constant 0 : index
    %66 = vector.load %arg13[%c0_30, %c0_31] : memref<1x32xf32, #tpu.memory_space<vmem>>, vector<1x32xf32>
    %67 = vector.broadcast %66 : vector<1x32xf32> to vector<8x32xf32>
    %68 = arith.mulf %65, %67 : vector<8x32xf32>
    %c0_32 = arith.constant 0 : index
    %c0_33 = arith.constant 0 : index
    %69 = vector.load %arg14[%c0_32, %c0_33] : memref<1x32xf32, #tpu.memory_space<vmem>>, vector<1x32xf32>
    %70 = vector.broadcast %69 : vector<1x32xf32> to vector<8x32xf32>
    %71 = arith.addf %68, %70 : vector<8x32xf32>
    %c0_34 = arith.constant 0 : index
    %c0_35 = arith.constant 0 : index
    %c0_36 = arith.constant 0 : index
    %72 = vector.load %arg15[%c0_34, %c0_35, %c0_36] : memref<1x8x32xf32, #tpu.memory_space<vmem>>, vector<1x8x32xf32>
    %73 = vector.shape_cast %72 : vector<1x8x32xf32> to vector<8x32xf32>
    %74 = vector.shape_cast %71 : vector<8x32xf32> to vector<1x8x32xf32>
    tpu.vector_store %arg15[%c0_34, %c0_35, %c0_36], %74 {strides = array<i32>} : memref<1x8x32xf32, #tpu.memory_space<vmem>>, vector<1x8x32xf32>,
    return
  }
  func.func @transform_0(%arg0: i32, %arg1: i32) -> (i32, i32, i32) {
    %c0_i32 = arith.constant 0 : i32
    %c0_i32_0 = arith.constant 0 : i32
    return %arg0, %arg1, %c0_i32 : i32, i32, i32
  }
  func.func @transform_1(%arg0: i32, %arg1: i32) -> (i32, i32, i32) {
    %c0_i32 = arith.constant 0 : i32
    %c0_i32_0 = arith.constant 0 : i32
    %c0_i32_1 = arith.constant 0 : i32
    return %arg0, %c0_i32, %c0_i32_0 : i32, i32, i32
  }
  func.func @transform_2(%arg0: i32, %arg1: i32) -> (i32, i32, i32) {
    %c0_i32 = arith.constant 0 : i32
    %c0_i32_0 = arith.constant 0 : i32
    %c0_i32_1 = arith.constant 0 : i32
    return %arg0, %c0_i32, %c0_i32_0 : i32, i32, i32
  }
  func.func @transform_3(%arg0: i32, %arg1: i32) -> (i32, i32) {
    %c0_i32 = arith.constant 0 : i32
    %c0_i32_0 = arith.constant 0 : i32
    %c0_i32_1 = arith.constant 0 : i32
    return %c0_i32, %c0_i32_0 : i32, i32
  }
  func.func @transform_4(%arg0: i32, %arg1: i32) -> (i32, i32) {
    %c0_i32 = arith.constant 0 : i32
    %c0_i32_0 = arith.constant 0 : i32
    %c0_i32_1 = arith.constant 0 : i32
    return %c0_i32, %c0_i32_0 : i32, i32
  }
  func.func @transform_5(%arg0: i32, %arg1: i32) -> (i32, i32) {
    %c0_i32 = arith.constant 0 : i32
    %c0_i32_0 = arith.constant 0 : i32
    %c0_i32_1 = arith.constant 0 : i32
    return %c0_i32, %c0_i32_0 : i32, i32
  }
  func.func @transform_6(%arg0: i32, %arg1: i32) -> (i32, i32) {
    %c0_i32 = arith.constant 0 : i32
    %c0_i32_0 = arith.constant 0 : i32
    %c0_i32_1 = arith.constant 0 : i32
    return %c0_i32, %c0_i32_0 : i32, i32
  }
  func.func @transform_7(%arg0: i32, %arg1: i32) -> (i32, i32) {
    %c0_i32 = arith.constant 0 : i32
    %c0_i32_0 = arith.constant 0 : i32
    %c0_i32_1 = arith.constant 0 : i32
    return %c0_i32, %c0_i32_0 : i32, i32
  }
  func.func @transform_8(%arg0: i32, %arg1: i32) -> (i32, i32) {
    %c0_i32 = arith.constant 0 : i32
    %c0_i32_0 = arith.constant 0 : i32
    %c0_i32_1 = arith.constant 0 : i32
    return %c0_i32, %c0_i32_0 : i32, i32
  }
  func.func @transform_9(%arg0: i32, %arg1: i32) -> (i32, i32) {
    %c0_i32 = arith.constant 0 : i32
    %c0_i32_0 = arith.constant 0 : i32
    %c0_i32_1 = arith.constant 0 : i32
    return %c0_i32, %c0_i32_0 : i32, i32
  }
  func.func @transform_10(%arg0: i32, %arg1: i32) -> (i32, i32) {
    %c0_i32 = arith.constant 0 : i32
    %c0_i32_0 = arith.constant 0 : i32
    %c0_i32_1 = arith.constant 0 : i32
    return %c0_i32, %c0_i32_0 : i32, i32
  }
  func.func @transform_11(%arg0: i32, %arg1: i32) -> (i32, i32) {
    %c0_i32 = arith.constant 0 : i32
    %c0_i32_0 = arith.constant 0 : i32
    %c0_i32_1 = arith.constant 0 : i32
    return %c0_i32, %c0_i32_0 : i32, i32
  }
  func.func @transform_12(%arg0: i32, %arg1: i32) -> (i32, i32) {
    %c0_i32 = arith.constant 0 : i32
    %c0_i32_0 = arith.constant 0 : i32
    %c0_i32_1 = arith.constant 0 : i32
    return %c0_i32, %c0_i32_0 : i32, i32
  }
  func.func @transform_13(%arg0: i32, %arg1: i32) -> (i32, i32, i32) {
    %c0_i32 = arith.constant 0 : i32
    %c0_i32_0 = arith.constant 0 : i32
    return %arg0, %arg1, %c0_i32 : i32, i32, i32
  }
  func.func @transform_14(%arg0: i32, %arg1: i32) -> (i32, i32, i32, i32) {
    %c0_i32 = arith.constant 0 : i32
    %c0_i32_0 = arith.constant 0 : i32
    %c0_i32_1 = arith.constant 0 : i32
    return %arg0, %c0_i32, %arg1, %c0_i32_0 : i32, i32, i32, i32
  }
}

</mosaic_0001>

<llo_original>
// kernel: tpu_custom_call.1
$region0: #{tpu_custom_call.1}
  #allocation0 [shape = 'u32[]', space=smem, size = 0x4, offset = 0x4, fixed_abs, tag = 'smem constant byte address 0x4 - core index']
  #allocation1 [shape = 'u32[144,128]{1,0:T(1,128)}', space=vmem, size = 0x12000, scoped, tag = 'internal scratch']
  #allocation2 [shape = 'bf16[8,32]{1,0:T(8,128)(2,1)}', space=vmem, size = 0x800, scoped, tag = 'scratch operand']
  #allocation3 [shape = 'bf16[8,32]{1,0:T(8,128)(2,1)}', space=vmem, size = 0x800, scoped, tag = 'scratch operand']
  %s0 = inlined_call_operand.hbm [shape: f32[2,8,32], index: 0, kind: input, shape index: {}]
  %s1 = inlined_call_operand.hbm [shape: f32[2,8,32], index: 1, kind: input, shape index: {}]
  %s2 = inlined_call_operand.hbm [shape: f32[2,8,32], index: 2, kind: input, shape index: {}]
  %s3 = inlined_call_operand.hbm [shape: bf16[32,32], index: 3, kind: input, shape index: {}]
  %s4 = inlined_call_operand.hbm [shape: f32[1,32], index: 4, kind: input, shape index: {}]
  %s5 = inlined_call_operand.hbm [shape: bf16[32,32], index: 5, kind: input, shape index: {}]
  %s6 = inlined_call_operand.hbm [shape: f32[1,32], index: 6, kind: input, shape index: {}]
  %s7 = inlined_call_operand.hbm [shape: bf16[32,32], index: 7, kind: input, shape index: {}]
  %s8 = inlined_call_operand.hbm [shape: f32[1,32], index: 8, kind: input, shape index: {}]
  %s9 = inlined_call_operand.vmem [shape: bf16[32,32], index: 9, kind: input, shape index: {}]
  %s10 = inlined_call_operand.vmem [shape: f32[1,32], index: 10, kind: input, shape index: {}]
  %s11 = inlined_call_operand.vmem [shape: f32[1,32], index: 11, kind: input, shape index: {}]
  %s12 = inlined_call_operand.vmem [shape: f32[1,32], index: 12, kind: input, shape index: {}]
  %s13 = inlined_call_operand.hbm [shape: f32[2,8,32], index: 13, kind: output, shape index: {0}]
  %s14 = inlined_call_operand.hbm [shape: bf16[2,4,8,8], index: 14, kind: output, shape index: {1}]
  %15 = xla_tuple %s13, %s14
  %s16 = sld [smem:[#allocation0]]
  $region133: #{tpu_custom_call.1} parent=0
    _
  %s18 = ssub.s32 1, %s16
  %s19 = scalar_select 0, %s18, %s16
  $region1: #{tpu_custom_call.1} parent=0
    #allocation4 [shape = 'u8[8192]{0}', space=vmem, size = 0x2000, scoped, tag = 'input window, operand 0']
    #allocation5 [shape = 's32[2]{0}', space=sflag, size = 0x8, scoped, tag = 'scoped memory for tpu_custom_call.1']
    #allocation6 [shape = 's32[2]{0}', space=sflag, size = 0x8, scoped, tag = 'scoped memory for tpu_custom_call.1']
    #allocation7 [shape = 'u8[8192]{0}', space=vmem, size = 0x2000, scoped, tag = 'input window, operand 1']
    #allocation8 [shape = 's32[2]{0}', space=sflag, size = 0x8, scoped, tag = 'scoped memory for tpu_custom_call.1']
    #allocation9 [shape = 'u8[8192]{0}', space=vmem, size = 0x2000, scoped, tag = 'input window, operand 2']
    #allocation10 [shape = 'u8[8192]{0}', space=vmem, size = 0x2000, scoped, tag = 'input window, operand 3, single buffered']
    #allocation11 [shape = 's32[1]{0}', space=sflag, size = 0x4, scoped, tag = 'scoped memory for tpu_custom_call.1']
    #allocation12 [shape = 'u8[512]{0}', space=vmem, size = 0x400, scoped, tag = 'input window, operand 4, single buffered']
    #allocation13 [shape = 'u8[8192]{0}', space=vmem, size = 0x2000, scoped, tag = 'input window, operand 5, single buffered']
    #allocation14 [shape = 's32[1]{0}', space=sflag, size = 0x4, scoped, tag = 'scoped memory for tpu_custom_call.1']
    #allocation15 [shape = 'u8[512]{0}', space=vmem, size = 0x400, scoped, tag = 'input window, operand 6, single buffered']
    #allocation16 [shape = 'u8[8192]{0}', space=vmem, size = 0x2000, scoped, tag = 'input window, operand 7, single buffered']
    #allocation17 [shape = 's32[1]{0}', space=sflag, size = 0x4, scoped, tag = 'scoped memory for tpu_custom_call.1']
    #allocation18 [shape = 'u8[512]{0}', space=vmem, size = 0x400, scoped, tag = 'input window, operand 8, single buffered']
    #allocation19 [shape = 'u8[8192]{0}', space=vmem, size = 0x2000, scoped, tag = 'output window, operand 0']
    #allocation20 [shape = 'u8[16384]{0}', space=vmem, size = 0x4000, scoped, tag = 'output window, operand 1']
    #allocation21 [shape = 's32[2]{0}', space=sflag, size = 0x8, scoped, tag = 'scoped memory for tpu_custom_call.1']
    %20 = vsyncpa [#allocation5], 0
    %s21 = scalar_lea.sflag [#allocation5], 1
    %22 = vsyncpa %s21, 0
    %23 = vsyncpa [#allocation8], 0
    %s24 = scalar_lea.sflag [#allocation8], 1
    %25 = vsyncpa %s24, 0
    %26 = vsyncpa [#allocation11], 0
    %27 = vsyncpa [#allocation14], 0
    %28 = vsyncpa [#allocation17], 0
    %29 = vsyncpa [#allocation6], 0
    %s30 = scalar_lea.sflag [#allocation6], 1
    %31 = vsyncpa %s30, 0
    %32 = vsyncpa [#allocation21], 0
    %s33 = scalar_lea.sflag [#allocation21], 1
    %34 = vsyncpa %s33, 0
    loop: start=0, step=1, limit=4
    $region2: #{tpu_custom_call.1} parent=1 // loop_pre_header
      _
    $region3: #{tpu_custom_call.1} parent=1 // loop_header
      %s36 = sphi 0, %s40
      %p37 = scmp.ge.s32.totalorder %s36, 4
      %s43 = sphi 0, %s55
      %s44 = sphi 0, %s51
      %s45 = sphi 0, %s43
      %s46 = sphi 0, %s44
      %s47 = sphi 0, %s45
      %s48 = sphi 0, %s46
      %s60 = sphi 0, %s62
      %s63 = sphi 0, %s60
      %s64 = sphi 0, %s63
      %s80 = sphi 0, %s64
      %s86 = sphi 0, %s88
      %s89 = sphi 0, %s86
      %s90 = sphi 0, %s89
      %s106 = sphi 0, %s90
      %s112 = sphi 0, %s114
      %s115 = sphi 0, %s112
      %s116 = sphi 0, %s115
      %s132 = sphi 0, %s116
      %s136 = sphi 0, %s136
      %s138 = sphi 0, %s136
      %s139 = sphi 0, %s138
      %s153 = sphi 0, %s139
      %s157 = sphi 0, %s157
      %s159 = sphi 0, %s157
      %s160 = sphi 0, %s159
      %s174 = sphi 0, %s160
      %s178 = sphi 0, %s178
      %s180 = sphi 0, %s178
      %s181 = sphi 0, %s180
      %s195 = sphi 0, %s181
      %s199 = sphi 0, %s199
      %s201 = sphi 0, %s199
      %s202 = sphi 0, %s201
      %s216 = sphi 0, %s202
      %s220 = sphi 0, %s220
      %s222 = sphi 0, %s220
      %s223 = sphi 0, %s222
      %s237 = sphi 0, %s223
      %s241 = sphi 0, %s241
      %s243 = sphi 0, %s241
      %s244 = sphi 0, %s243
      %s258 = sphi 0, %s244
      %s262 = sphi 0, %s262
      %s264 = sphi 0, %s262
      %s265 = sphi 0, %s264
      %s279 = sphi 0, %s265
      %s283 = sphi 0, %s283
      %s285 = sphi 0, %s283
      %s286 = sphi 0, %s285
      %s300 = sphi 0, %s286
      %s304 = sphi 0, %s304
      %s306 = sphi 0, %s304
      %s307 = sphi 0, %s306
      %s321 = sphi 0, %s307
      %s325 = sphi 0, %s325
      %s327 = sphi 0, %s325
      %s328 = sphi 0, %s327
      %s342 = sphi 0, %s328
      %s350 = sphi 0, %s352
      %s353 = sphi 0, %s350
      %s354 = sphi 0, %s353
      %s370 = sphi 0, %s354
      %s378 = sphi 0, %s380
      %s381 = sphi 0, %s378
      %s382 = sphi 0, %s381
      %s398 = sphi 0, %s382
    $region4: #{tpu_custom_call.1} parent=1 // loop_header_branch
      %39 = sbr.rel (%p37) target = $region8
    $region5: #{tpu_custom_call.1} parent=1 // loop_body
      %s41 = ssub.s32 %s36, 1
      %s42 = ssub.s32 %s36, 2
      %s49 = sadd.s32 1, %s44
      %p50 = scmp.ge.s32.totalorder %s49, 1
      %s51 = scalar_select %p50, 0, %s49
      %s52 = sadd.s32 1, %s43
      %s53 = scalar_select %p50, %s52, %s43
      %p54 = scmp.ge.s32.totalorder %s53, 2
      %s55 = scalar_select %p54, 0, %s53
      %s56 = ssub.s32 %s43, %s55
      %s57 = ssub.s32 %s44, %s51
      %s58 = sor.u32 %s56, %s57
      %p59 = scmp.eq.s32.totalorder %s58, 0
      %s61 = sadd.s32 %s60, 1
      %s62 = scalar_select %p59, %s60, %s61
      %p65 = pneg %p59
      %p66 = scmp.eq.s32.totalorder %s36, 1
      %p67 = por %p65, %p66
      %p68 = scmp.ne.s32.totalorder %s60, %s63
      %p69 = scmp.eq.s32.totalorder %s36, 0
      %p70 = por %p68, %p69
      %p71 = scmp.ne.s32.totalorder %s60, %s63
      %p72 = scmp.eq.s32.totalorder %s41, 1
      %p73 = por %p71, %p72
      %p74 = scmp.ne.s32.totalorder %s63, %s64
      %p75 = scmp.eq.s32.totalorder %s41, 0
      %p76 = por %p74, %p75
      %p77 = scmp.ne.s32.totalorder %s63, %s64
      %p78 = scmp.eq.s32.totalorder %s42, 1
      %p79 = por %p77, %p78
      %p81 = scmp.ne.s32.totalorder %s64, %s80
      %p82 = scmp.eq.s32.totalorder %s42, 0
      %p83 = por %p81, %p82
      %s84 = ssub.s32 %s43, %s55
      %p85 = scmp.eq.s32.totalorder %s84, 0
      %s87 = sadd.s32 %s86, 1
      %s88 = scalar_select %p85, %s86, %s87
      %p91 = pneg %p85
      %p92 = scmp.eq.s32.totalorder %s36, 1
      %p93 = por %p91, %p92
      %p94 = scmp.ne.s32.totalorder %s86, %s89
      %p95 = scmp.eq.s32.totalorder %s36, 0
      %p96 = por %p94, %p95
      %p97 = scmp.ne.s32.totalorder %s86, %s89
      %p98 = scmp.eq.s32.totalorder %s41, 1
      %p99 = por %p97, %p98
      %p100 = scmp.ne.s32.totalorder %s89, %s90
      %p101 = scmp.eq.s32.totalorder %s41, 0
      %p102 = por %p100, %p101
      %p103 = scmp.ne.s32.totalorder %s89, %s90
      %p104 = scmp.eq.s32.totalorder %s42, 1
      %p105 = por %p103, %p104
      %p107 = scmp.ne.s32.totalorder %s90, %s106
      %p108 = scmp.eq.s32.totalorder %s42, 0
      %p109 = por %p107, %p108
      %s110 = ssub.s32 %s43, %s55
      %p111 = scmp.eq.s32.totalorder %s110, 0
      %s113 = sadd.s32 %s112, 1
      %s114 = scalar_select %p111, %s112, %s113
      %p117 = pneg %p111
      %p118 = scmp.eq.s32.totalorder %s36, 1
      %p119 = por %p117, %p118
      %p120 = scmp.ne.s32.totalorder %s112, %s115
      %p121 = scmp.eq.s32.totalorder %s36, 0
      %p122 = por %p120, %p121
      %p123 = scmp.ne.s32.totalorder %s112, %s115
      %p124 = scmp.eq.s32.totalorder %s41, 1
      %p125 = por %p123, %p124
      %p126 = scmp.ne.s32.totalorder %s115, %s116
      %p127 = scmp.eq.s32.totalorder %s41, 0
      %p128 = por %p126, %p127
      %p129 = scmp.ne.s32.totalorder %s115, %s116
      %p130 = scmp.eq.s32.totalorder %s42, 1
      %p131 = por %p129, %p130
      %p133 = scmp.ne.s32.totalorder %s116, %s132
      %p134 = scmp.eq.s32.totalorder %s42, 0
      %p135 = por %p133, %p134
      %s137 = sadd.s32 %s136, 1
      %p140 = scmp.eq.s32.totalorder %s36, 1
      %p141 = scmp.ne.s32.totalorder %s136, %s138
      %p142 = scmp.eq.s32.totalorder %s36, 0
      %p143 = por %p141, %p142
      %p144 = scmp.ne.s32.totalorder %s136, %s138
      %p145 = scmp.eq.s32.totalorder %s41, 1
      %p146 = por %p144, %p145
      %p147 = scmp.ne.s32.totalorder %s138, %s139
      %p148 = scmp.eq.s32.totalorder %s41, 0
      %p149 = por %p147, %p148
      %p150 = scmp.ne.s32.totalorder %s138, %s139
      %p151 = scmp.eq.s32.totalorder %s42, 1
      %p152 = por %p150, %p151
      %p154 = scmp.ne.s32.totalorder %s139, %s153
      %p155 = scmp.eq.s32.totalorder %s42, 0
      %p156 = por %p154, %p155
      %s158 = sadd.s32 %s157, 1
      %p161 = scmp.eq.s32.totalorder %s36, 1
      %p162 = scmp.ne.s32.totalorder %s157, %s159
      %p163 = scmp.eq.s32.totalorder %s36, 0
      %p164 = por %p162, %p163
      %p165 = scmp.ne.s32.totalorder %s157, %s159
      %p166 = scmp.eq.s32.totalorder %s41, 1
      %p167 = por %p165, %p166
      %p168 = scmp.ne.s32.totalorder %s159, %s160
      %p169 = scmp.eq.s32.totalorder %s41, 0
      %p170 = por %p168, %p169
      %p171 = scmp.ne.s32.totalorder %s159, %s160
      %p172 = scmp.eq.s32.totalorder %s42, 1
      %p173 = por %p171, %p172
      %p175 = scmp.ne.s32.totalorder %s160, %s174
      %p176 = scmp.eq.s32.totalorder %s42, 0
      %p177 = por %p175, %p176
      %s179 = sadd.s32 %s178, 1
      %p182 = scmp.eq.s32.totalorder %s36, 1
      %p183 = scmp.ne.s32.totalorder %s178, %s180
      %p184 = scmp.eq.s32.totalorder %s36, 0
      %p185 = por %p183, %p184
      %p186 = scmp.ne.s32.totalorder %s178, %s180
      %p187 = scmp.eq.s32.totalorder %s41, 1
      %p188 = por %p186, %p187
      %p189 = scmp.ne.s32.totalorder %s180, %s181
      %p190 = scmp.eq.s32.totalorder %s41, 0
      %p191 = por %p189, %p190
      %p192 = scmp.ne.s32.totalorder %s180, %s181
      %p193 = scmp.eq.s32.totalorder %s42, 1
      %p194 = por %p192, %p193
      %p196 = scmp.ne.s32.totalorder %s181, %s195
      %p197 = scmp.eq.s32.totalorder %s42, 0
      %p198 = por %p196, %p197
      %s200 = sadd.s32 %s199, 1
      %p203 = scmp.eq.s32.totalorder %s36, 1
      %p204 = scmp.ne.s32.totalorder %s199, %s201
      %p205 = scmp.eq.s32.totalorder %s36, 0
      %p206 = por %p204, %p205
      %p207 = scmp.ne.s32.totalorder %s199, %s201
      %p208 = scmp.eq.s32.totalorder %s41, 1
      %p209 = por %p207, %p208
      %p210 = scmp.ne.s32.totalorder %s201, %s202
      %p211 = scmp.eq.s32.totalorder %s41, 0
      %p212 = por %p210, %p211
      %p213 = scmp.ne.s32.totalorder %s201, %s202
      %p214 = scmp.eq.s32.totalorder %s42, 1
      %p215 = por %p213, %p214
      %p217 = scmp.ne.s32.totalorder %s202, %s216
      %p218 = scmp.eq.s32.totalorder %s42, 0
      %p219 = por %p217, %p218
      %s221 = sadd.s32 %s220, 1
      %p224 = scmp.eq.s32.totalorder %s36, 1
      %p225 = scmp.ne.s32.totalorder %s220, %s222
      %p226 = scmp.eq.s32.totalorder %s36, 0
      %p227 = por %p225, %p226
      %p228 = scmp.ne.s32.totalorder %s220, %s222
      %p229 = scmp.eq.s32.totalorder %s41, 1
      %p230 = por %p228, %p229
      %p231 = scmp.ne.s32.totalorder %s222, %s223
      %p232 = scmp.eq.s32.totalorder %s41, 0
      %p233 = por %p231, %p232
      %p234 = scmp.ne.s32.totalorder %s222, %s223
      %p235 = scmp.eq.s32.totalorder %s42, 1
      %p236 = por %p234, %p235
      %p238 = scmp.ne.s32.totalorder %s223, %s237
      %p239 = scmp.eq.s32.totalorder %s42, 0
      %p240 = por %p238, %p239
      %s242 = sadd.s32 %s241, 1
      %p245 = scmp.eq.s32.totalorder %s36, 1
      %p246 = scmp.ne.s32.totalorder %s241, %s243
      %p247 = scmp.eq.s32.totalorder %s36, 0
      %p248 = por %p246, %p247
      %p249 = scmp.ne.s32.totalorder %s241, %s243
      %p250 = scmp.eq.s32.totalorder %s41, 1
      %p251 = por %p249, %p250
      %p252 = scmp.ne.s32.totalorder %s243, %s244
      %p253 = scmp.eq.s32.totalorder %s41, 0
      %p254 = por %p252, %p253
      %p255 = scmp.ne.s32.totalorder %s243, %s244
      %p256 = scmp.eq.s32.totalorder %s42, 1
      %p257 = por %p255, %p256
      %p259 = scmp.ne.s32.totalorder %s244, %s258
      %p260 = scmp.eq.s32.totalorder %s42, 0
      %p261 = por %p259, %p260
      %s263 = sadd.s32 %s262, 1
      %p266 = scmp.eq.s32.totalorder %s36, 1
      %p267 = scmp.ne.s32.totalorder %s262, %s264
      %p268 = scmp.eq.s32.totalorder %s36, 0
      %p269 = por %p267, %p268
      %p270 = scmp.ne.s32.totalorder %s262, %s264
      %p271 = scmp.eq.s32.totalorder %s41, 1
      %p272 = por %p270, %p271
      %p273 = scmp.ne.s32.totalorder %s264, %s265
      %p274 = scmp.eq.s32.totalorder %s41, 0
      %p275 = por %p273, %p274
      %p276 = scmp.ne.s32.totalorder %s264, %s265
      %p277 = scmp.eq.s32.totalorder %s42, 1
      %p278 = por %p276, %p277
      %p280 = scmp.ne.s32.totalorder %s265, %s279
      %p281 = scmp.eq.s32.totalorder %s42, 0
      %p282 = por %p280, %p281
      %s284 = sadd.s32 %s283, 1
      %p287 = scmp.eq.s32.totalorder %s36, 1
      %p288 = scmp.ne.s32.totalorder %s283, %s285
      %p289 = scmp.eq.s32.totalorder %s36, 0
      %p290 = por %p288, %p289
      %p291 = scmp.ne.s32.totalorder %s283, %s285
      %p292 = scmp.eq.s32.totalorder %s41, 1
      %p293 = por %p291, %p292
      %p294 = scmp.ne.s32.totalorder %s285, %s286
      %p295 = scmp.eq.s32.totalorder %s41, 0
      %p296 = por %p294, %p295
      %p297 = scmp.ne.s32.totalorder %s285, %s286
      %p298 = scmp.eq.s32.totalorder %s42, 1
      %p299 = por %p297, %p298
      %p301 = scmp.ne.s32.totalorder %s286, %s300
      %p302 = scmp.eq.s32.totalorder %s42, 0
      %p303 = por %p301, %p302
      %s305 = sadd.s32 %s304, 1
      %p308 = scmp.eq.s32.totalorder %s36, 1
      %p309 = scmp.ne.s32.totalorder %s304, %s306
      %p310 = scmp.eq.s32.totalorder %s36, 0
      %p311 = por %p309, %p310
      %p312 = scmp.ne.s32.totalorder %s304, %s306
      %p313 = scmp.eq.s32.totalorder %s41, 1
      %p314 = por %p312, %p313
      %p315 = scmp.ne.s32.totalorder %s306, %s307
      %p316 = scmp.eq.s32.totalorder %s41, 0
      %p317 = por %p315, %p316
      %p318 = scmp.ne.s32.totalorder %s306, %s307
      %p319 = scmp.eq.s32.totalorder %s42, 1
      %p320 = por %p318, %p319
      %p322 = scmp.ne.s32.totalorder %s307, %s321
      %p323 = scmp.eq.s32.totalorder %s42, 0
      %p324 = por %p322, %p323
      %s326 = sadd.s32 %s325, 1
      %p329 = scmp.eq.s32.totalorder %s36, 1
      %p330 = scmp.ne.s32.totalorder %s325, %s327
      %p331 = scmp.eq.s32.totalorder %s36, 0
      %p332 = por %p330, %p331
      %p333 = scmp.ne.s32.totalorder %s325, %s327
      %p334 = scmp.eq.s32.totalorder %s41, 1
      %p335 = por %p333, %p334
      %p336 = scmp.ne.s32.totalorder %s327, %s328
      %p337 = scmp.eq.s32.totalorder %s41, 0
      %p338 = por %p336, %p337
      %p339 = scmp.ne.s32.totalorder %s327, %s328
      %p340 = scmp.eq.s32.totalorder %s42, 1
      %p341 = por %p339, %p340
      %p343 = scmp.ne.s32.totalorder %s328, %s342
      %p344 = scmp.eq.s32.totalorder %s42, 0
      %p345 = por %p343, %p344
      %s346 = ssub.s32 %s43, %s55
      %s347 = ssub.s32 %s44, %s51
      %s348 = sor.u32 %s346, %s347
      %p349 = scmp.eq.s32.totalorder %s348, 0
      %s351 = sadd.s32 %s350, 1
      %s352 = scalar_select %p349, %s350, %s351
      %p355 = pneg %p349
      %p356 = scmp.eq.s32.totalorder %s36, 1
      %p357 = por %p355, %p356
      %p358 = scmp.ne.s32.totalorder %s350, %s353
      %p359 = scmp.eq.s32.totalorder %s36, 0
      %p360 = por %p358, %p359
      %p361 = scmp.ne.s32.totalorder %s350, %s353
      %p362 = scmp.eq.s32.totalorder %s41, 1
      %p363 = por %p361, %p362
      %p364 = scmp.ne.s32.totalorder %s353, %s354
      %p365 = scmp.eq.s32.totalorder %s41, 0
      %p366 = por %p364, %p365
      %p367 = scmp.ne.s32.totalorder %s353, %s354
      %p368 = scmp.eq.s32.totalorder %s42, 1
      %p369 = por %p367, %p368
      %p371 = scmp.ne.s32.totalorder %s354, %s370
      %p372 = scmp.eq.s32.totalorder %s42, 0
      %p373 = por %p371, %p372
      %s374 = ssub.s32 %s43, %s55
      %s375 = ssub.s32 %s44, %s51
      %s376 = sor.u32 %s374, %s375
      %p377 = scmp.eq.s32.totalorder %s376, 0
      %s379 = sadd.s32 %s378, 1
      %s380 = scalar_select %p377, %s378, %s379
      %p383 = pneg %p377
      %p384 = scmp.eq.s32.totalorder %s36, 1
      %p385 = por %p383, %p384
      %p386 = scmp.ne.s32.totalorder %s378, %s381
      %p387 = scmp.eq.s32.totalorder %s36, 0
      %p388 = por %p386, %p387
      %p389 = scmp.ne.s32.totalorder %s378, %s381
      %p390 = scmp.eq.s32.totalorder %s41, 1
      %p391 = por %p389, %p390
      %p392 = scmp.ne.s32.totalorder %s381, %s382
      %p393 = scmp.eq.s32.totalorder %s41, 0
      %p394 = por %p392, %p393
      %p395 = scmp.ne.s32.totalorder %s381, %s382
      %p396 = scmp.eq.s32.totalorder %s42, 1
      %p397 = por %p395, %p396
      %p399 = scmp.ne.s32.totalorder %s382, %s398
      %p400 = scmp.eq.s32.totalorder %s42, 0
      %p401 = por %p399, %p400
      %p402 = scmp.le.s32.totalorder 1, %s36
      %p403 = scmp.lt.s32.totalorder %s36, 3
      %p404 = pnand %p402, %p403
      %p405 = pneg %p404
      // Predicated region
      $region9: #{tpu_custom_call.1} parent=5 // pred_check
        _
      $region10: #{tpu_custom_call.1} parent=5 // pred_check_branch
        %407 = sbr.rel (%p404) target = $region12
      $region11: #{tpu_custom_call.1} parent=5 // pred_region
        %s408 = ssub.s32 %s36, 1
        // Predicated region
        $region13: #{tpu_custom_call.1} parent=11 // pred_check
          %p409 = pneg %p149
        $region14: #{tpu_custom_call.1} parent=11 // pred_check_branch
          %411 = sbr.rel (%p409) target = $region16
        $region15: #{tpu_custom_call.1} parent=11 // pred_region
          %s413 = ssub.s32 256, 256
          %414 = vsyncadd [#allocation11], %s413
          %s415 = sshll.u32 [#allocation10], 4
          %s416 = int_to_ptr.vmem [resolvable:$true] %s415
          %421 = dma.hbm_to_vmem [thread:$0]  %s3, 256, %s416, [#allocation11], 64, 64, 4
        $region16: #{tpu_custom_call.1} parent=11 // pred_fallthru
          _
        // Predicated region
        $region17: #{tpu_custom_call.1} parent=11 // pred_check
          %p422 = pneg %p170
        $region18: #{tpu_custom_call.1} parent=11 // pred_check_branch
          %424 = sbr.rel (%p422) target = $region20
        $region19: #{tpu_custom_call.1} parent=11 // pred_region
          %s426 = ssub.s32 16, 16
          %427 = vsyncadd [#allocation11], %s426
          %s429 = sshll.u32 [#allocation12], 4
          %s430 = int_to_ptr.vmem [resolvable:$true] %s429
          %432 = dma.hbm_to_vmem [thread:$0]  %s4, 16, %s430, [#allocation11]
        $region20: #{tpu_custom_call.1} parent=11 // pred_fallthru
          _
        // Predicated region
        $region21: #{tpu_custom_call.1} parent=11 // pred_check
          %p433 = pneg %p191
        $region22: #{tpu_custom_call.1} parent=11 // pred_check_branch
          %435 = sbr.rel (%p433) target = $region24
        $region23: #{tpu_custom_call.1} parent=11 // pred_region
          %s437 = ssub.s32 256, 256
          %438 = vsyncadd [#allocation14], %s437
          %s439 = sshll.u32 [#allocation13], 4
          %s440 = int_to_ptr.vmem [resolvable:$true] %s439
          %445 = dma.hbm_to_vmem [thread:$0]  %s5, 256, %s440, [#allocation14], 64, 64, 4
        $region24: #{tpu_custom_call.1} parent=11 // pred_fallthru
          _
        // Predicated region
        $region25: #{tpu_custom_call.1} parent=11 // pred_check
          %p446 = pneg %p212
        $region26: #{tpu_custom_call.1} parent=11 // pred_check_branch
          %448 = sbr.rel (%p446) target = $region28
        $region27: #{tpu_custom_call.1} parent=11 // pred_region
          %s450 = ssub.s32 16, 16
          %451 = vsyncadd [#allocation14], %s450
          %s453 = sshll.u32 [#allocation15], 4
          %s454 = int_to_ptr.vmem [resolvable:$true] %s453
          %456 = dma.hbm_to_vmem [thread:$0]  %s6, 16, %s454, [#allocation14]
        $region28: #{tpu_custom_call.1} parent=11 // pred_fallthru
          _
        // Predicated region
        $region29: #{tpu_custom_call.1} parent=11 // pred_check
          %p457 = pneg %p233
        $region30: #{tpu_custom_call.1} parent=11 // pred_check_branch
          %459 = sbr.rel (%p457) target = $region32
        $region31: #{tpu_custom_call.1} parent=11 // pred_region
          %s461 = ssub.s32 256, 256
          %462 = vsyncadd [#allocation17], %s461
          %s463 = sshll.u32 [#allocation16], 4
          %s464 = int_to_ptr.vmem [resolvable:$true] %s463
          %469 = dma.hbm_to_vmem [thread:$0]  %s7, 256, %s464, [#allocation17], 64, 64, 4
        $region32: #{tpu_custom_call.1} parent=11 // pred_fallthru
          _
        // Predicated region
        $region33: #{tpu_custom_call.1} parent=11 // pred_check
          %p470 = pneg %p254
        $region34: #{tpu_custom_call.1} parent=11 // pred_check_branch
          %472 = sbr.rel (%p470) target = $region36
        $region35: #{tpu_custom_call.1} parent=11 // pred_region
          %s474 = ssub.s32 16, 16
          %475 = vsyncadd [#allocation17], %s474
          %s477 = sshll.u32 [#allocation18], 4
          %s478 = int_to_ptr.vmem [resolvable:$true] %s477
          %480 = dma.hbm_to_vmem [thread:$0]  %s8, 16, %s478, [#allocation17]
        $region36: #{tpu_custom_call.1} parent=11 // pred_fallthru
          _
        // Predicated region
        $region37: #{tpu_custom_call.1} parent=11 // pred_check
          %p481 = pneg %p275
        $region38: #{tpu_custom_call.1} parent=11 // pred_check_branch
          %483 = sbr.rel (%p481) target = $region40
        $region39: #{tpu_custom_call.1} parent=11 // pred_region
          _
        $region40: #{tpu_custom_call.1} parent=11 // pred_fallthru
          _
        // Predicated region
        $region41: #{tpu_custom_call.1} parent=11 // pred_check
          %p484 = pneg %p296
        $region42: #{tpu_custom_call.1} parent=11 // pred_check_branch
          %486 = sbr.rel (%p484) target = $region44
        $region43: #{tpu_custom_call.1} parent=11 // pred_region
          _
        $region44: #{tpu_custom_call.1} parent=11 // pred_fallthru
          _
        // Predicated region
        $region45: #{tpu_custom_call.1} parent=11 // pred_check
          %p487 = pneg %p317
        $region46: #{tpu_custom_call.1} parent=11 // pred_check_branch
          %489 = sbr.rel (%p487) target = $region48
        $region47: #{tpu_custom_call.1} parent=11 // pred_region
          _
        $region48: #{tpu_custom_call.1} parent=11 // pred_fallthru
          _
        // Predicated region
        $region49: #{tpu_custom_call.1} parent=11 // pred_check
          %p490 = pneg %p338
        $region50: #{tpu_custom_call.1} parent=11 // pred_check_branch
          %492 = sbr.rel (%p490) target = $region52
        $region51: #{tpu_custom_call.1} parent=11 // pred_region
          _
        $region52: #{tpu_custom_call.1} parent=11 // pred_fallthru
          _
      $region12: #{tpu_custom_call.1} parent=5 // pred_fallthru
        _
      %p493 = scmp.lt.s32.totalorder %s36, 2
      // Predicated region
      $region53: #{tpu_custom_call.1} parent=5 // pred_check
        %p494 = pneg %p493
      $region54: #{tpu_custom_call.1} parent=5 // pred_check_branch
        %496 = sbr.rel (%p494) target = $region56
      $region55: #{tpu_custom_call.1} parent=5 // pred_region
        // Predicated region
        $region57: #{tpu_custom_call.1} parent=55 // pred_check
          %p497 = pneg %p70
        $region58: #{tpu_custom_call.1} parent=55 // pred_check_branch
          %499 = sbr.rel (%p497) target = $region60
        $region59: #{tpu_custom_call.1} parent=55 // pred_region
          %s500 = sand.u32 %s60, 1
          %s501 = scalar_lea.sflag [#allocation5], %s500
          %s502 = sand.u32 %s60, 1
          %s503 = smul.addr %s502, 8
          %s504 = scalar_lea.vmem [#allocation4], %s503
          %s506 = ssub.s32 128, 128
          %507 = vsyncadd %s501, %s506
          %s508 = sadd.s32 %s44, %s43
          %s509 = smul.addr %s508, 128
          %s510 = scalar_lea.hbm %s0, %s509
          %s512 = sshll.u32 %s504, 4
          %s513 = int_to_ptr.vmem [resolvable:$true] %s512
          %515 = dma.hbm_to_vmem [thread:$0]  %s510, 128, %s513, %s501
        $region60: #{tpu_custom_call.1} parent=55 // pred_fallthru
          _
        // Predicated region
        $region61: #{tpu_custom_call.1} parent=55 // pred_check
          %p516 = pneg %p96
        $region62: #{tpu_custom_call.1} parent=55 // pred_check_branch
          %518 = sbr.rel (%p516) target = $region64
        $region63: #{tpu_custom_call.1} parent=55 // pred_region
          %s519 = sand.u32 %s36, 1
          %s520 = scalar_lea.sflag [#allocation8], %s519
          %s521 = sand.u32 %s86, 1
          %s522 = smul.addr %s521, 8
          %s523 = scalar_lea.vmem [#allocation7], %s522
          %s525 = ssub.s32 128, 128
          %526 = vsyncadd %s520, %s525
          %s527 = smul.addr %s43, 128
          %s528 = scalar_lea.hbm %s1, %s527
          %s530 = sshll.u32 %s523, 4
          %s531 = int_to_ptr.vmem [resolvable:$true] %s530
          %533 = dma.hbm_to_vmem [thread:$0]  %s528, 128, %s531, %s520
        $region64: #{tpu_custom_call.1} parent=55 // pred_fallthru
          _
        // Predicated region
        $region65: #{tpu_custom_call.1} parent=55 // pred_check
          %p534 = pneg %p122
        $region66: #{tpu_custom_call.1} parent=55 // pred_check_branch
          %536 = sbr.rel (%p534) target = $region68
        $region67: #{tpu_custom_call.1} parent=55 // pred_region
          %s537 = sand.u32 %s36, 1
          %s538 = scalar_lea.sflag [#allocation8], %s537
          %s539 = sand.u32 %s112, 1
          %s540 = smul.addr %s539, 8
          %s541 = scalar_lea.vmem [#allocation9], %s540
          %s543 = ssub.s32 128, 128
          %544 = vsyncadd %s538, %s543
          %s545 = smul.addr %s43, 128
          %s546 = scalar_lea.hbm %s2, %s545
          %s548 = sshll.u32 %s541, 4
          %s549 = int_to_ptr.vmem [resolvable:$true] %s548
          %551 = dma.hbm_to_vmem [thread:$0]  %s546, 128, %s549, %s538
        $region68: #{tpu_custom_call.1} parent=55 // pred_fallthru
          _
      $region56: #{tpu_custom_call.1} parent=5 // pred_fallthru
        _
      %p552 = scmp.le.s32.totalorder 1, %s36
      %p553 = scmp.lt.s32.totalorder %s36, 3
      %p554 = pnand %p552, %p553
      %p555 = pneg %p554
      // Predicated region
      $region69: #{tpu_custom_call.1} parent=5 // pred_check
        _
      $region70: #{tpu_custom_call.1} parent=5 // pred_check_branch
        %557 = sbr.rel (%p554) target = $region72
      $region71: #{tpu_custom_call.1} parent=5 // pred_region
        %s558 = ssub.s32 %s36, 1
        %s559 = sand.u32 %s63, 1
        %s560 = scalar_lea.sflag [#allocation5], %s559
        %s561 = sand.u32 %s63, 1
        %s562 = smul.addr %s561, 8
        %s563 = scalar_lea.vmem [#allocation4], %s562
        // Predicated region
        $region73: #{tpu_custom_call.1} parent=71 // pred_check
          %p564 = pneg %p76
        $region74: #{tpu_custom_call.1} parent=71 // pred_check_branch
          %566 = sbr.rel (%p564) target = $region76
        $region75: #{tpu_custom_call.1} parent=71 // pred_region
          %567 = dma.done %s560, 128
        $region76: #{tpu_custom_call.1} parent=71 // pred_fallthru
          _
        %s568 = sand.u32 %s41, 1
        %s569 = scalar_lea.sflag [#allocation8], %s568
        %s570 = sand.u32 %s89, 1
        %s571 = smul.addr %s570, 8
        %s572 = scalar_lea.vmem [#allocation7], %s571
        // Predicated region
        $region77: #{tpu_custom_call.1} parent=71 // pred_check
          %p573 = pneg %p102
        $region78: #{tpu_custom_call.1} parent=71 // pred_check_branch
          %575 = sbr.rel (%p573) target = $region80
        $region79: #{tpu_custom_call.1} parent=71 // pred_region
          %576 = dma.done %s569, 128
        $region80: #{tpu_custom_call.1} parent=71 // pred_fallthru
          _
        %s577 = sand.u32 %s41, 1
        %s578 = scalar_lea.sflag [#allocation8], %s577
        %s579 = sand.u32 %s115, 1
        %s580 = smul.addr %s579, 8
        %s581 = scalar_lea.vmem [#allocation9], %s580
        // Predicated region
        $region81: #{tpu_custom_call.1} parent=71 // pred_check
          %p582 = pneg %p128
        $region82: #{tpu_custom_call.1} parent=71 // pred_check_branch
          %584 = sbr.rel (%p582) target = $region84
        $region83: #{tpu_custom_call.1} parent=71 // pred_region
          %585 = dma.done %s578, 128
        $region84: #{tpu_custom_call.1} parent=71 // pred_fallthru
          _
        // Predicated region
        $region85: #{tpu_custom_call.1} parent=71 // pred_check
          %p586 = pneg %p149
        $region86: #{tpu_custom_call.1} parent=71 // pred_check_branch
          %588 = sbr.rel (%p586) target = $region88
        $region87: #{tpu_custom_call.1} parent=71 // pred_region
          %589 = dma.done [#allocation11], 256
        $region88: #{tpu_custom_call.1} parent=71 // pred_fallthru
          _
        // Predicated region
        $region89: #{tpu_custom_call.1} parent=71 // pred_check
          %p590 = pneg %p170
        $region90: #{tpu_custom_call.1} parent=71 // pred_check_branch
          %592 = sbr.rel (%p590) target = $region92
        $region91: #{tpu_custom_call.1} parent=71 // pred_region
          %593 = dma.done [#allocation11], 16
        $region92: #{tpu_custom_call.1} parent=71 // pred_fallthru
          _
        // Predicated region
        $region93: #{tpu_custom_call.1} parent=71 // pred_check
          %p594 = pneg %p191
        $region94: #{tpu_custom_call.1} parent=71 // pred_check_branch
          %596 = sbr.rel (%p594) target = $region96
        $region95: #{tpu_custom_call.1} parent=71 // pred_region
          %597 = dma.done [#allocation14], 256
        $region96: #{tpu_custom_call.1} parent=71 // pred_fallthru
          _
        // Predicated region
        $region97: #{tpu_custom_call.1} parent=71 // pred_check
          %p598 = pneg %p212
        $region98: #{tpu_custom_call.1} parent=71 // pred_check_branch
          %600 = sbr.rel (%p598) target = $region100
        $region99: #{tpu_custom_call.1} parent=71 // pred_region
          %601 = dma.done [#allocation14], 16
        $region100: #{tpu_custom_call.1} parent=71 // pred_fallthru
          _
        // Predicated region
        $region101: #{tpu_custom_call.1} parent=71 // pred_check
          %p602 = pneg %p233
        $region102: #{tpu_custom_call.1} parent=71 // pred_check_branch
          %604 = sbr.rel (%p602) target = $region104
        $region103: #{tpu_custom_call.1} parent=71 // pred_region
          %605 = dma.done [#allocation17], 256
        $region104: #{tpu_custom_call.1} parent=71 // pred_fallthru
          _
        // Predicated region
        $region105: #{tpu_custom_call.1} parent=71 // pred_check
          %p606 = pneg %p254
        $region106: #{tpu_custom_call.1} parent=71 // pred_check_branch
          %608 = sbr.rel (%p606) target = $region108
        $region107: #{tpu_custom_call.1} parent=71 // pred_region
          %609 = dma.done [#allocation17], 16
        $region108: #{tpu_custom_call.1} parent=71 // pred_fallthru
          _
        %s610 = sand.u32 %s63, 1
        %s611 = scalar_lea.sflag [#allocation5], %s610
        %s612 = sand.u32 %s63, 1
        %s613 = smul.addr %s612, 8
        %s614 = scalar_lea.vmem [#allocation4], %s613
        %p615 = pneg %p76
        %p616 = pneg %p73
        %s617 = sand.u32 %s41, 1
        %s618 = scalar_lea.sflag [#allocation8], %s617
        %s619 = sand.u32 %s89, 1
        %s620 = smul.addr %s619, 8
        %s621 = scalar_lea.vmem [#allocation7], %s620
        %p622 = pneg %p102
        %p623 = pneg %p99
        %s624 = sand.u32 %s41, 1
        %s625 = scalar_lea.sflag [#allocation8], %s624
        %s626 = sand.u32 %s115, 1
        %s627 = smul.addr %s626, 8
        %s628 = scalar_lea.vmem [#allocation9], %s627
        %p629 = pneg %p128
        %p630 = pneg %p125
        %p631 = pneg %p149
        %p632 = pneg %p146
        %p633 = pneg %p170
        %p634 = pneg %p167
        %p635 = pneg %p191
        %p636 = pneg %p188
        %p637 = pneg %p212
        %p638 = pneg %p209
        %p639 = pneg %p233
        %p640 = pneg %p230
        %p641 = pneg %p254
        %p642 = pneg %p251
        %p643 = pneg %p275
        %p644 = pneg %p272
        %p645 = pneg %p296
        %p646 = pneg %p293
        %p647 = pneg %p317
        %p648 = pneg %p314
        %p649 = pneg %p338
        %p650 = pneg %p335
        %p651 = pneg %p366
        %p652 = pneg %p363
        %s653 = sand.u32 %s353, 1
        %s654 = scalar_lea.sflag [#allocation6], %s653
        %s655 = sand.u32 %s353, 1
        %s656 = smul.addr %s655, 8
        %s657 = scalar_lea.vmem [#allocation19], %s656
        %p658 = pneg %p394
        %p659 = pneg %p391
        %s660 = sand.u32 %s381, 1
        %s661 = scalar_lea.sflag [#allocation21], %s660
        %s662 = sand.u32 %s381, 1
        %s663 = smul.addr %s662, 16
        %s664 = scalar_lea.vmem [#allocation20], %s663
        %v666 = vld [vmem:[%s563] sm:$0xff]
        %p667 = scmp.eq.s32.totalorder %s46, 0
        // Predicated region
        $region109: #{tpu_custom_call.1} parent=71 // pred_check
          %p668 = pneg %p667
        $region110: #{tpu_custom_call.1} parent=71 // pred_check_branch
          %670 = sbr.rel (%p668) target = $region112
        $region111: #{tpu_custom_call.1} parent=71 // pred_region
          %v671 = vld [vmem:[%s572] sm:$0xff]
          %v672 = vpack.c.bf16 %v671, %v671
          %v673 = vld [vmem:[#allocation13] sm:$0xf]
          %v674 = vld [vmem:[#allocation13 + $0x4] sm:$0xf]
          %v675 = vld [vmem:[#allocation13 + $0x8] sm:$0xf]
          %v676 = vld [vmem:[#allocation13 + $0xc] sm:$0xf]
          %v677 = vld [vmem:[#allocation15] sm:$0x1]
          %v679 = vlaneseq
          %v680 = vshrl.u32 %v679, 7
          %v681 = vsub.s32 0, %v680
          %v682 = vrot.slane %v677, %v681
          %v688 = vunpack.c.l.b16 %v673
          %v689 = vunpack.c.l.b16 %v674
          %v690 = vunpack.c.l.b16 %v675
          %v691 = vunpack.c.l.b16 %v676
          %v692 = vpack.c.b16 %v689, %v688
          %v693 = vpack.c.b16 %v691, %v690
          %vm696 = vcmask 261120
          %v698 = vsel %vm696, %v672, 0
          %700 = vmatprep.subr.bf16.mxu0 0
          %701 = vmatpush1.bf16.msra.mxu0 0
          %702 = vmatprep.subr.bf16.mxu0 0
          %703 = vmatpush1.bf16.msra.mxu0 0
          %704 = vmatprep.subr.bf16.mxu0 0
          %705 = vmatpush1.bf16.msra.mxu0 0
          %706 = vmatprep.subr.bf16.mxu0 0
          %707 = vmatpush1.bf16.msra.mxu0 0
          %708 = vmatprep.subr.bf16.mxu0 0
          %709 = vmatpush1.bf16.msra.mxu0 0
          %710 = vmatprep.subr.bf16.mxu0 0
          %711 = vmatpush1.bf16.msra.mxu0 0
          %712 = vmatprep.subr.bf16.mxu0 0
          %713 = vmatpush1.bf16.msra.mxu0 %v693
          %714 = vmatprep.subr.bf16.mxu0 0
          %715 = vmatpush1.bf16.msra.mxu0 %v692
          %716 = vmatprep.subr.bf16.mxu0 0
          %717 = vmatpush2.bf16.msra.mxu0 0
          %718 = vmatprep.subr.bf16.mxu0 0
          %719 = vmatpush2.bf16.msra.mxu0 0
          %720 = vmatprep.subr.bf16.mxu0 0
          %721 = vmatpush2.bf16.msra.mxu0 0
          %722 = vmatprep.subr.bf16.mxu0 0
          %723 = vmatpush2.bf16.msra.mxu0 0
          %724 = vmatprep.subr.bf16.mxu0 0
          %725 = vmatpush2.bf16.msra.mxu0 0
          %726 = vmatprep.subr.bf16.mxu0 0
          %727 = vmatpush2.bf16.msra.mxu0 0
          %728 = vmatprep.subr.bf16.mxu0 0
          %729 = vmatpush2.bf16.msra.mxu0 0
          %730 = vmatprep.subr.bf16.mxu0 0
          %731 = vmatpush2.bf16.msra.mxu0 0
          %732 = vmatprep.mubr.bf16.mxu0 0
          %733 = vmatmul.mubr.bf16.gmra.mxu0 %v698
          %v734 = vpop.f32.mrf.mxu0
          %v735 = vadd.f32 %v682, %v734
          %v736 = vpop.f32.mrf.mxu0
          %v737 = vpop.f32.mrf.mxu0
          %v738 = vpop.f32.mrf.mxu0
          %739 = vdwg.mxu0
          %v740 = vpack.c.bf16 %v735, %v735
          %vm741 = vcmask 257024
          %742 = vst.msk [vmem:[#allocation2] sm:$0xf] %vm741, %v740
          %v743 = vld [vmem:[%s581] sm:$0xff]
          %v744 = vpack.c.bf16 %v743, %v743
          %v745 = vld [vmem:[#allocation16] sm:$0xf]
          %v746 = vld [vmem:[#allocation16 + $0x4] sm:$0xf]
          %v747 = vld [vmem:[#allocation16 + $0x8] sm:$0xf]
          %v748 = vld [vmem:[#allocation16 + $0xc] sm:$0xf]
          %v749 = vld [vmem:[#allocation18] sm:$0x1]
          %v751 = vlaneseq
          %v752 = vshrl.u32 %v751, 7
          %v753 = vsub.s32 0, %v752
          %v754 = vrot.slane %v749, %v753
          %v760 = vunpack.c.l.b16 %v745
          %v761 = vunpack.c.l.b16 %v746
          %v762 = vunpack.c.l.b16 %v747
          %v763 = vunpack.c.l.b16 %v748
          %v764 = vpack.c.b16 %v761, %v760
          %v765 = vpack.c.b16 %v763, %v762
          %v769 = vsel %vm696, %v744, 0
          %771 = vmatprep.subr.bf16.mxu0 0
          %772 = vmatpush1.bf16.msra.mxu0 0
          %773 = vmatprep.subr.bf16.mxu0 0
          %774 = vmatpush1.bf16.msra.mxu0 0
          %775 = vmatprep.subr.bf16.mxu0 0
          %776 = vmatpush1.bf16.msra.mxu0 0
          %777 = vmatprep.subr.bf16.mxu0 0
          %778 = vmatpush1.bf16.msra.mxu0 0
          %779 = vmatprep.subr.bf16.mxu0 0
          %780 = vmatpush1.bf16.msra.mxu0 0
          %781 = vmatprep.subr.bf16.mxu0 0
          %782 = vmatpush1.bf16.msra.mxu0 0
          %783 = vmatprep.subr.bf16.mxu0 0
          %784 = vmatpush1.bf16.msra.mxu0 %v765
          %785 = vmatprep.subr.bf16.mxu0 0
          %786 = vmatpush1.bf16.msra.mxu0 %v764
          %787 = vmatprep.subr.bf16.mxu0 0
          %788 = vmatpush2.bf16.msra.mxu0 0
          %789 = vmatprep.subr.bf16.mxu0 0
          %790 = vmatpush2.bf16.msra.mxu0 0
          %791 = vmatprep.subr.bf16.mxu0 0
          %792 = vmatpush2.bf16.msra.mxu0 0
          %793 = vmatprep.subr.bf16.mxu0 0
          %794 = vmatpush2.bf16.msra.mxu0 0
          %795 = vmatprep.subr.bf16.mxu0 0
          %796 = vmatpush2.bf16.msra.mxu0 0
          %797 = vmatprep.subr.bf16.mxu0 0
          %798 = vmatpush2.bf16.msra.mxu0 0
          %799 = vmatprep.subr.bf16.mxu0 0
          %800 = vmatpush2.bf16.msra.mxu0 0
          %801 = vmatprep.subr.bf16.mxu0 0
          %802 = vmatpush2.bf16.msra.mxu0 0
          %803 = vmatprep.mubr.bf16.mxu0 0
          %804 = vmatmul.mubr.bf16.gmra.mxu0 %v769
          %v805 = vpop.f32.mrf.mxu0
          %v806 = vadd.f32 %v754, %v805
          %v807 = vpop.f32.mrf.mxu0
          %v808 = vpop.f32.mrf.mxu0
          %v809 = vpop.f32.mrf.mxu0
          %810 = vdwg.mxu0
          %v811 = vpack.c.bf16 %v806, %v806
          %812 = vst.msk [vmem:[#allocation3] sm:$0xf] %vm741, %v811
        $region112: #{tpu_custom_call.1} parent=71 // pred_fallthru
          _
        %v813 = vpack.c.bf16 %v666, %v666
        %v814 = vld [vmem:[#allocation10] sm:$0xf]
        %v815 = vld [vmem:[#allocation10 + $0x4] sm:$0xf]
        %v816 = vld [vmem:[#allocation10 + $0x8] sm:$0xf]
        %v817 = vld [vmem:[#allocation10 + $0xc] sm:$0xf]
        %v818 = vld [vmem:[#allocation12] sm:$0x1]
        %v820 = vlaneseq
        %v821 = vshrl.u32 %v820, 7
        %v822 = vsub.s32 0, %v821
        %v823 = vrot.slane %v818, %v822
        %v829 = vunpack.c.l.b16 %v814
        %v830 = vunpack.c.l.b16 %v815
        %v831 = vunpack.c.l.b16 %v816
        %v832 = vunpack.c.l.b16 %v817
        %v833 = vpack.c.b16 %v830, %v829
        %v834 = vpack.c.b16 %v832, %v831
        %vm837 = vcmask 261120
        %v839 = vsel %vm837, %v813, 0
        %841 = vmatprep.subr.bf16.mxu0 0
        %842 = vmatpush1.bf16.msra.mxu0 0
        %843 = vmatprep.subr.bf16.mxu0 0
        %844 = vmatpush1.bf16.msra.mxu0 0
        %845 = vmatprep.subr.bf16.mxu0 0
        %846 = vmatpush1.bf16.msra.mxu0 0
        %847 = vmatprep.subr.bf16.mxu0 0
        %848 = vmatpush1.bf16.msra.mxu0 0
        %849 = vmatprep.subr.bf16.mxu0 0
        %850 = vmatpush1.bf16.msra.mxu0 0
        %851 = vmatprep.subr.bf16.mxu0 0
        %852 = vmatpush1.bf16.msra.mxu0 0
        %853 = vmatprep.subr.bf16.mxu0 0
        %854 = vmatpush1.bf16.msra.mxu0 %v834
        %855 = vmatprep.subr.bf16.mxu0 0
        %856 = vmatpush1.bf16.msra.mxu0 %v833
        %857 = vmatprep.subr.bf16.mxu0 0
        %858 = vmatpush2.bf16.msra.mxu0 0
        %859 = vmatprep.subr.bf16.mxu0 0
        %860 = vmatpush2.bf16.msra.mxu0 0
        %861 = vmatprep.subr.bf16.mxu0 0
        %862 = vmatpush2.bf16.msra.mxu0 0
        %863 = vmatprep.subr.bf16.mxu0 0
        %864 = vmatpush2.bf16.msra.mxu0 0
        %865 = vmatprep.subr.bf16.mxu0 0
        %866 = vmatpush2.bf16.msra.mxu0 0
        %867 = vmatprep.subr.bf16.mxu0 0
        %868 = vmatpush2.bf16.msra.mxu0 0
        %869 = vmatprep.subr.bf16.mxu0 0
        %870 = vmatpush2.bf16.msra.mxu0 0
        %871 = vmatprep.subr.bf16.mxu0 0
        %872 = vmatpush2.bf16.msra.mxu0 0
        %873 = vmatprep.mubr.bf16.mxu0 0
        %874 = vmatmul.mubr.bf16.gmra.mxu0 %v839
        %v875 = vpop.f32.mrf.mxu0
        %v876 = vadd.f32 %v823, %v875
        %v877 = vpop.f32.mrf.mxu0
        %v878 = vpop.f32.mrf.mxu0
        %v879 = vpop.f32.mrf.mxu0
        %880 = vdwg.mxu0
        %v881 = vmul.f32 %v876, 0.35355338
        %v882 = vpack.c.bf16 %v881, %v881
        %884 = vrot.lane.b32.xlu0 %v882, 120
        %v885 = vpop.permute.xlu0 %884
        %886 = vrot.lane.b32.xlu0 %v882, 112
        %v887 = vpop.permute.xlu0 %886
        %888 = vrot.lane.b32.xlu0 %v882, 104
        %v889 = vpop.permute.xlu0 %888
        %v891 = vunpack.c.l.s4 1983009808
        %v892 = vunpack.c.0.s8 %v891
        %v893 = vlaneseq
        %v894 = vshrl.u32 %v893, 7
        %v895 = vsub.s32 %v892, %v894
        %v896 = vrot.slane %v882, %v895
        %v899 = vunpack.c.l.s4 1983009808
        %v900 = vunpack.c.0.s8 %v899
        %v901 = vlaneseq
        %v902 = vshrl.u32 %v901, 7
        %v903 = vsub.s32 %v900, %v902
        %v904 = vrot.slane %v887, %v903
        %v905 = vcombine.low %v896, %v904
        %v906 = vcombine.high %v896, %v904
        %v908 = vunpack.c.l.s4 1934713408
        %v909 = vunpack.c.0.s8 %v908
        %v910 = vlaneseq
        %v911 = vshrl.u32 %v910, 7
        %v912 = vsub.s32 %v909, %v911
        %v913 = vrot.slane %v905, %v912
        %v915 = vunpack.c.l.s4 1934713408
        %v916 = vunpack.c.0.s8 %v915
        %v917 = vlaneseq
        %v918 = vshrl.u32 %v917, 7
        %v919 = vsub.s32 %v916, %v918
        %v920 = vrot.slane %v906, %v919
        %v921 = vcombine.high %v913, 0
        %v922 = vcombine.high %v920, 0
        %v925 = vunpack.c.l.s4 1983009808
        %v926 = vunpack.c.0.s8 %v925
        %v927 = vlaneseq
        %v928 = vshrl.u32 %v927, 7
        %v929 = vsub.s32 %v926, %v928
        %v930 = vrot.slane %v885, %v929
        %v933 = vunpack.c.l.s4 1983009808
        %v934 = vunpack.c.0.s8 %v933
        %v935 = vlaneseq
        %v936 = vshrl.u32 %v935, 7
        %v937 = vsub.s32 %v934, %v936
        %v938 = vrot.slane %v889, %v937
        %v939 = vcombine.low %v930, %v938
        %v940 = vcombine.high %v930, %v938
        %v942 = vunpack.c.l.s4 1934713408
        %v943 = vunpack.c.0.s8 %v942
        %v944 = vlaneseq
        %v945 = vshrl.u32 %v944, 7
        %v946 = vsub.s32 %v943, %v945
        %v947 = vrot.slane %v939, %v946
        %v949 = vunpack.c.l.s4 1934713408
        %v950 = vunpack.c.0.s8 %v949
        %v951 = vlaneseq
        %v952 = vshrl.u32 %v951, 7
        %v953 = vsub.s32 %v950, %v952
        %v954 = vrot.slane %v940, %v953
        %v955 = vcombine.high %v947, 0
        %v956 = vcombine.high %v954, 0
        %v959 = vpack.i.b16 %v947, %v913
        %v961 = vshrl.u32 %v913, 16
        %v962 = vshrl.u32 %v947, 16
        %v963 = vpack.i.b16 %v962, %v961
        %v967 = vpack.i.b16 %v955, %v921
        %v969 = vshrl.u32 %v921, 16
        %v970 = vshrl.u32 %v955, 16
        %v971 = vpack.i.b16 %v970, %v969
        %v975 = vpack.i.b16 %v954, %v920
        %v977 = vshrl.u32 %v920, 16
        %v978 = vshrl.u32 %v954, 16
        %v979 = vpack.i.b16 %v978, %v977
        %v983 = vpack.i.b16 %v956, %v922
        %v985 = vshrl.u32 %v922, 16
        %v986 = vshrl.u32 %v956, 16
        %v987 = vpack.i.b16 %v986, %v985
        %v989 = vcombine.low %v959, %v975
        %v991 = vunpack.c.l.s4 1983009808
        %v992 = vunpack.c.0.s8 %v991
        %v993 = vlaneseq
        %v994 = vshrl.u32 %v993, 7
        %v995 = vsub.s32 %v992, %v994
        %v996 = vrot.slane %v989, %v995
        %v997 = vcombine.low %v967, %v983
        %v999 = vunpack.c.l.s4 1983009808
        %v1000 = vunpack.c.0.s8 %v999
        %v1001 = vlaneseq
        %v1002 = vshrl.u32 %v1001, 7
        %v1003 = vsub.s32 %v1000, %v1002
        %v1004 = vrot.slane %v997, %v1003
        %v1005 = vcombine.low %v996, %v1004
        %v1007 = vunpack.c.l.s4 1934713408
        %v1008 = vunpack.c.0.s8 %v1007
        %v1009 = vlaneseq
        %v1010 = vshrl.u32 %v1009, 7
        %v1011 = vsub.s32 %v1008, %v1010
        %v1012 = vrot.slane %v1005, %v1011
        %v1013 = vcombine.high %v1012, 0
        %v1014 = vcombine.low %v963, %v979
        %v1016 = vunpack.c.l.s4 1983009808
        %v1017 = vunpack.c.0.s8 %v1016
        %v1018 = vlaneseq
        %v1019 = vshrl.u32 %v1018, 7
        %v1020 = vsub.s32 %v1017, %v1019
        %v1021 = vrot.slane %v1014, %v1020
        %v1022 = vcombine.low %v971, %v987
        %v1024 = vunpack.c.l.s4 1983009808
        %v1025 = vunpack.c.0.s8 %v1024
        %v1026 = vlaneseq
        %v1027 = vshrl.u32 %v1026, 7
        %v1028 = vsub.s32 %v1025, %v1027
        %v1029 = vrot.slane %v1022, %v1028
        %v1030 = vcombine.low %v1021, %v1029
        %v1032 = vunpack.c.l.s4 1934713408
        %v1033 = vunpack.c.0.s8 %v1032
        %v1034 = vlaneseq
        %v1035 = vshrl.u32 %v1034, 7
        %v1036 = vsub.s32 %v1033, %v1035
        %v1037 = vrot.slane %v1030, %v1036
        %v1038 = vcombine.high %v1037, 0
        %v1041 = vpack.i.b16 %v1037, %v1012
        %v1042 = vshrl.u32 %v1012, 16
        %v1043 = vshrl.u32 %v1037, 16
        %v1044 = vpack.i.b16 %v1043, %v1042
        %v1047 = vpack.i.b16 %v1038, %v1013
        %v1048 = vshrl.u32 %v1013, 16
        %v1049 = vshrl.u32 %v1038, 16
        %v1050 = vpack.i.b16 %v1049, %v1048
        %v1051 = vld [vmem:[#allocation2] sm:$0xf]
        %1053 = vrot.lane.b32.xlu0 %v1051, 120
        %v1054 = vpop.permute.xlu0 %1053
        %1055 = vrot.lane.b32.xlu0 %v1051, 112
        %v1056 = vpop.permute.xlu0 %1055
        %1057 = vrot.lane.b32.xlu0 %v1051, 104
        %v1058 = vpop.permute.xlu0 %1057
        %v1061 = vpack.i.b16 %v1054, %v1051
        %v1062 = vshrl.u32 %v1051, 16
        %v1063 = vshrl.u32 %v1054, 16
        %v1064 = vpack.i.b16 %v1063, %v1062
        %v1067 = vpack.i.b16 %v1058, %v1056
        %v1068 = vshrl.u32 %v1056, 16
        %v1069 = vshrl.u32 %v1058, 16
        %v1070 = vpack.i.b16 %v1069, %v1068
        %v1073 = vunpack.c.l.s4 1983009808
        %v1074 = vunpack.c.0.s8 %v1073
        %v1075 = vlaneseq
        %v1076 = vshrl.u32 %v1075, 7
        %v1077 = vsub.s32 %v1074, %v1076
        %v1078 = vrot.slane %v1061, %v1077
        %v1081 = vunpack.c.l.s4 1983009808
        %v1082 = vunpack.c.0.s8 %v1081
        %v1083 = vlaneseq
        %v1084 = vshrl.u32 %v1083, 7
        %v1085 = vsub.s32 %v1082, %v1084
        %v1086 = vrot.slane %v1067, %v1085
        %v1087 = vcombine.low %v1078, %v1086
        %v1088 = vcombine.high %v1078, %v1086
        %v1090 = vunpack.c.l.s4 1934713408
        %v1091 = vunpack.c.0.s8 %v1090
        %v1092 = vlaneseq
        %v1093 = vshrl.u32 %v1092, 7
        %v1094 = vsub.s32 %v1091, %v1093
        %v1095 = vrot.slane %v1087, %v1094
        %v1097 = vunpack.c.l.s4 1934713408
        %v1098 = vunpack.c.0.s8 %v1097
        %v1099 = vlaneseq
        %v1100 = vshrl.u32 %v1099, 7
        %v1101 = vsub.s32 %v1098, %v1100
        %v1102 = vrot.slane %v1088, %v1101
        %v1103 = vcombine.high %v1095, 0
        %v1104 = vcombine.high %v1102, 0
        %v1107 = vunpack.c.l.s4 1983009808
        %v1108 = vunpack.c.0.s8 %v1107
        %v1109 = vlaneseq
        %v1110 = vshrl.u32 %v1109, 7
        %v1111 = vsub.s32 %v1108, %v1110
        %v1112 = vrot.slane %v1064, %v1111
        %v1115 = vunpack.c.l.s4 1983009808
        %v1116 = vunpack.c.0.s8 %v1115
        %v1117 = vlaneseq
        %v1118 = vshrl.u32 %v1117, 7
        %v1119 = vsub.s32 %v1116, %v1118
        %v1120 = vrot.slane %v1070, %v1119
        %v1121 = vcombine.low %v1112, %v1120
        %v1122 = vcombine.high %v1112, %v1120
        %v1124 = vunpack.c.l.s4 1934713408
        %v1125 = vunpack.c.0.s8 %v1124
        %v1126 = vlaneseq
        %v1127 = vshrl.u32 %v1126, 7
        %v1128 = vsub.s32 %v1125, %v1127
        %v1129 = vrot.slane %v1121, %v1128
        %v1131 = vunpack.c.l.s4 1934713408
        %v1132 = vunpack.c.0.s8 %v1131
        %v1133 = vlaneseq
        %v1134 = vshrl.u32 %v1133, 7
        %v1135 = vsub.s32 %v1132, %v1134
        %v1136 = vrot.slane %v1122, %v1135
        %v1137 = vcombine.high %v1129, 0
        %v1138 = vcombine.high %v1136, 0
        %v1139 = vcombine.low %v1095, %v1102
        %v1141 = vunpack.c.l.s4 1983009808
        %v1142 = vunpack.c.0.s8 %v1141
        %v1143 = vlaneseq
        %v1144 = vshrl.u32 %v1143, 7
        %v1145 = vsub.s32 %v1142, %v1144
        %v1146 = vrot.slane %v1139, %v1145
        %v1147 = vcombine.low %v1103, %v1104
        %v1149 = vunpack.c.l.s4 1983009808
        %v1150 = vunpack.c.0.s8 %v1149
        %v1151 = vlaneseq
        %v1152 = vshrl.u32 %v1151, 7
        %v1153 = vsub.s32 %v1150, %v1152
        %v1154 = vrot.slane %v1147, %v1153
        %v1155 = vcombine.low %v1146, %v1154
        %v1157 = vunpack.c.l.s4 1934713408
        %v1158 = vunpack.c.0.s8 %v1157
        %v1159 = vlaneseq
        %v1160 = vshrl.u32 %v1159, 7
        %v1161 = vsub.s32 %v1158, %v1160
        %v1162 = vrot.slane %v1155, %v1161
        %v1163 = vcombine.high %v1162, 0
        %v1164 = vcombine.low %v1129, %v1136
        %v1166 = vunpack.c.l.s4 1983009808
        %v1167 = vunpack.c.0.s8 %v1166
        %v1168 = vlaneseq
        %v1169 = vshrl.u32 %v1168, 7
        %v1170 = vsub.s32 %v1167, %v1169
        %v1171 = vrot.slane %v1164, %v1170
        %v1172 = vcombine.low %v1137, %v1138
        %v1174 = vunpack.c.l.s4 1983009808
        %v1175 = vunpack.c.0.s8 %v1174
        %v1176 = vlaneseq
        %v1177 = vshrl.u32 %v1176, 7
        %v1178 = vsub.s32 %v1175, %v1177
        %v1179 = vrot.slane %v1172, %v1178
        %v1180 = vcombine.low %v1171, %v1179
        %v1182 = vunpack.c.l.s4 1934713408
        %v1183 = vunpack.c.0.s8 %v1182
        %v1184 = vlaneseq
        %v1185 = vshrl.u32 %v1184, 7
        %v1186 = vsub.s32 %v1183, %v1185
        %v1187 = vrot.slane %v1180, %v1186
        %v1188 = vcombine.high %v1187, 0
        %v1191 = vpack.i.b16 %v1187, %v1162
        %v1192 = vshrl.u32 %v1162, 16
        %v1193 = vshrl.u32 %v1187, 16
        %v1194 = vpack.i.b16 %v1193, %v1192
        %v1197 = vpack.i.b16 %v1188, %v1163
        %v1198 = vshrl.u32 %v1163, 16
        %v1199 = vshrl.u32 %v1188, 16
        %v1200 = vpack.i.b16 %v1199, %v1198
        %v1201 = vld [vmem:[#allocation3] sm:$0xf]
        %1203 = vrot.lane.b32.xlu0 %v1201, 120
        %v1204 = vpop.permute.xlu0 %1203
        %1205 = vrot.lane.b32.xlu0 %v1201, 112
        %v1206 = vpop.permute.xlu0 %1205
        %1207 = vrot.lane.b32.xlu0 %v1201, 104
        %v1208 = vpop.permute.xlu0 %1207
        %v1211 = vpack.i.b16 %v1204, %v1201
        %v1212 = vshrl.u32 %v1201, 16
        %v1213 = vshrl.u32 %v1204, 16
        %v1214 = vpack.i.b16 %v1213, %v1212
        %v1217 = vpack.i.b16 %v1208, %v1206
        %v1218 = vshrl.u32 %v1206, 16
        %v1219 = vshrl.u32 %v1208, 16
        %v1220 = vpack.i.b16 %v1219, %v1218
        %v1223 = vunpack.c.l.s4 1983009808
        %v1224 = vunpack.c.0.s8 %v1223
        %v1225 = vlaneseq
        %v1226 = vshrl.u32 %v1225, 7
        %v1227 = vsub.s32 %v1224, %v1226
        %v1228 = vrot.slane %v1211, %v1227
        %v1231 = vunpack.c.l.s4 1983009808
        %v1232 = vunpack.c.0.s8 %v1231
        %v1233 = vlaneseq
        %v1234 = vshrl.u32 %v1233, 7
        %v1235 = vsub.s32 %v1232, %v1234
        %v1236 = vrot.slane %v1217, %v1235
        %v1237 = vcombine.low %v1228, %v1236
        %v1238 = vcombine.high %v1228, %v1236
        %v1240 = vunpack.c.l.s4 1934713408
        %v1241 = vunpack.c.0.s8 %v1240
        %v1242 = vlaneseq
        %v1243 = vshrl.u32 %v1242, 7
        %v1244 = vsub.s32 %v1241, %v1243
        %v1245 = vrot.slane %v1237, %v1244
        %v1247 = vunpack.c.l.s4 1934713408
        %v1248 = vunpack.c.0.s8 %v1247
        %v1249 = vlaneseq
        %v1250 = vshrl.u32 %v1249, 7
        %v1251 = vsub.s32 %v1248, %v1250
        %v1252 = vrot.slane %v1238, %v1251
        %v1253 = vcombine.high %v1245, 0
        %v1254 = vcombine.high %v1252, 0
        %v1257 = vunpack.c.l.s4 1983009808
        %v1258 = vunpack.c.0.s8 %v1257
        %v1259 = vlaneseq
        %v1260 = vshrl.u32 %v1259, 7
        %v1261 = vsub.s32 %v1258, %v1260
        %v1262 = vrot.slane %v1214, %v1261
        %v1265 = vunpack.c.l.s4 1983009808
        %v1266 = vunpack.c.0.s8 %v1265
        %v1267 = vlaneseq
        %v1268 = vshrl.u32 %v1267, 7
        %v1269 = vsub.s32 %v1266, %v1268
        %v1270 = vrot.slane %v1220, %v1269
        %v1271 = vcombine.low %v1262, %v1270
        %v1272 = vcombine.high %v1262, %v1270
        %v1274 = vunpack.c.l.s4 1934713408
        %v1275 = vunpack.c.0.s8 %v1274
        %v1276 = vlaneseq
        %v1277 = vshrl.u32 %v1276, 7
        %v1278 = vsub.s32 %v1275, %v1277
        %v1279 = vrot.slane %v1271, %v1278
        %v1281 = vunpack.c.l.s4 1934713408
        %v1282 = vunpack.c.0.s8 %v1281
        %v1283 = vlaneseq
        %v1284 = vshrl.u32 %v1283, 7
        %v1285 = vsub.s32 %v1282, %v1284
        %v1286 = vrot.slane %v1272, %v1285
        %v1287 = vcombine.high %v1279, 0
        %v1288 = vcombine.high %v1286, 0
        %v1289 = vcombine.low %v1245, %v1252
        %v1291 = vunpack.c.l.s4 1983009808
        %v1292 = vunpack.c.0.s8 %v1291
        %v1293 = vlaneseq
        %v1294 = vshrl.u32 %v1293, 7
        %v1295 = vsub.s32 %v1292, %v1294
        %v1296 = vrot.slane %v1289, %v1295
        %v1297 = vcombine.low %v1253, %v1254
        %v1299 = vunpack.c.l.s4 1983009808
        %v1300 = vunpack.c.0.s8 %v1299
        %v1301 = vlaneseq
        %v1302 = vshrl.u32 %v1301, 7
        %v1303 = vsub.s32 %v1300, %v1302
        %v1304 = vrot.slane %v1297, %v1303
        %v1305 = vcombine.low %v1296, %v1304
        %v1307 = vunpack.c.l.s4 1934713408
        %v1308 = vunpack.c.0.s8 %v1307
        %v1309 = vlaneseq
        %v1310 = vshrl.u32 %v1309, 7
        %v1311 = vsub.s32 %v1308, %v1310
        %v1312 = vrot.slane %v1305, %v1311
        %v1313 = vcombine.high %v1312, 0
        %v1314 = vcombine.low %v1279, %v1286
        %v1316 = vunpack.c.l.s4 1983009808
        %v1317 = vunpack.c.0.s8 %v1316
        %v1318 = vlaneseq
        %v1319 = vshrl.u32 %v1318, 7
        %v1320 = vsub.s32 %v1317, %v1319
        %v1321 = vrot.slane %v1314, %v1320
        %v1322 = vcombine.low %v1287, %v1288
        %v1324 = vunpack.c.l.s4 1983009808
        %v1325 = vunpack.c.0.s8 %v1324
        %v1326 = vlaneseq
        %v1327 = vshrl.u32 %v1326, 7
        %v1328 = vsub.s32 %v1325, %v1327
        %v1329 = vrot.slane %v1322, %v1328
        %v1330 = vcombine.low %v1321, %v1329
        %v1332 = vunpack.c.l.s4 1934713408
        %v1333 = vunpack.c.0.s8 %v1332
        %v1334 = vlaneseq
        %v1335 = vshrl.u32 %v1334, 7
        %v1336 = vsub.s32 %v1333, %v1335
        %v1337 = vrot.slane %v1330, %v1336
        %v1338 = vcombine.high %v1337, 0
        %v1341 = vpack.i.b16 %v1337, %v1312
        %v1342 = vshrl.u32 %v1312, 16
        %v1343 = vshrl.u32 %v1337, 16
        %v1344 = vpack.i.b16 %v1343, %v1342
        %v1347 = vpack.i.b16 %v1338, %v1313
        %v1348 = vshrl.u32 %v1313, 16
        %v1349 = vshrl.u32 %v1338, 16
        %v1350 = vpack.i.b16 %v1349, %v1348
        %vm1351 = vcmask 64512
        %v1353 = vsel %vm1351, %v1041, 0
        %v1356 = vsel %vm1351, %v1191, 0
        %1358 = vmatprep.subr.bf16.mxu0 0
        %1359 = vmatpush1.bf16.xpose.msra.mxu0 0
        %1360 = vmatprep.subr.bf16.mxu0 0
        %1361 = vmatpush1.bf16.xpose.msra.mxu0 0
        %1362 = vmatprep.subr.bf16.mxu0 0
        %1363 = vmatpush1.bf16.xpose.msra.mxu0 0
        %1364 = vmatprep.subr.bf16.mxu0 0
        %1365 = vmatpush1.bf16.xpose.msra.mxu0 0
        %1366 = vmatprep.subr.bf16.mxu0 0
        %1367 = vmatpush1.bf16.xpose.msra.mxu0 0
        %1368 = vmatprep.subr.bf16.mxu0 0
        %1369 = vmatpush1.bf16.xpose.msra.mxu0 0
        %1370 = vmatprep.subr.bf16.mxu0 0
        %1371 = vmatpush1.bf16.xpose.msra.mxu0 0
        %1372 = vmatprep.subr.bf16.mxu0 0
        %1373 = vmatpush1.bf16.xpose.msra.mxu0 %v1356
        %1374 = vmatprep.subr.bf16.mxu0 0
        %1375 = vmatpush2.bf16.xpose.msra.mxu0 0
        %1376 = vmatprep.subr.bf16.mxu0 0
        %1377 = vmatpush2.bf16.xpose.msra.mxu0 0
        %1378 = vmatprep.subr.bf16.mxu0 0
        %1379 = vmatpush2.bf16.xpose.msra.mxu0 0
        %1380 = vmatprep.subr.bf16.mxu0 0
        %1381 = vmatpush2.bf16.xpose.msra.mxu0 0
        %1382 = vmatprep.subr.bf16.mxu0 0
        %1383 = vmatpush2.bf16.xpose.msra.mxu0 0
        %1384 = vmatprep.subr.bf16.mxu0 0
        %1385 = vmatpush2.bf16.xpose.msra.mxu0 0
        %1386 = vmatprep.subr.bf16.mxu0 0
        %1387 = vmatpush2.bf16.xpose.msra.mxu0 0
        %1388 = vmatprep.subr.bf16.mxu0 0
        %1389 = vmatpush2.bf16.xpose.msra.mxu0 0
        %1390 = vmatprep.mubr.bf16.mxu0 0
        %1391 = vmatmul.mubr.bf16.gmra.mxu0 %v1353
        %v1392 = vpop.f32.mrf.mxu0
        %v1393 = vadd.f32 0.0, %v1392
        %v1394 = vpop.f32.mrf.mxu0
        %v1395 = vpop.f32.mrf.mxu0
        %v1396 = vpop.f32.mrf.mxu0
        %1397 = vdwg.mxu0
        %v1399 = vsel %vm1351, %v1044, 0
        %v1402 = vsel %vm1351, %v1194, 0
        %1404 = vmatprep.subr.bf16.mxu0 0
        %1405 = vmatpush1.bf16.xpose.msra.mxu0 0
        %1406 = vmatprep.subr.bf16.mxu0 0
        %1407 = vmatpush1.bf16.xpose.msra.mxu0 0
        %1408 = vmatprep.subr.bf16.mxu0 0
        %1409 = vmatpush1.bf16.xpose.msra.mxu0 0
        %1410 = vmatprep.subr.bf16.mxu0 0
        %1411 = vmatpush1.bf16.xpose.msra.mxu0 0
        %1412 = vmatprep.subr.bf16.mxu0 0
        %1413 = vmatpush1.bf16.xpose.msra.mxu0 0
        %1414 = vmatprep.subr.bf16.mxu0 0
        %1415 = vmatpush1.bf16.xpose.msra.mxu0 0
        %1416 = vmatprep.subr.bf16.mxu0 0
        %1417 = vmatpush1.bf16.xpose.msra.mxu0 0
        %1418 = vmatprep.subr.bf16.mxu0 0
        %1419 = vmatpush1.bf16.xpose.msra.mxu0 %v1402
        %1420 = vmatprep.subr.bf16.mxu0 0
        %1421 = vmatpush2.bf16.xpose.msra.mxu0 0
        %1422 = vmatprep.subr.bf16.mxu0 0
        %1423 = vmatpush2.bf16.xpose.msra.mxu0 0
        %1424 = vmatprep.subr.bf16.mxu0 0
        %1425 = vmatpush2.bf16.xpose.msra.mxu0 0
        %1426 = vmatprep.subr.bf16.mxu0 0
        %1427 = vmatpush2.bf16.xpose.msra.mxu0 0
        %1428 = vmatprep.subr.bf16.mxu0 0
        %1429 = vmatpush2.bf16.xpose.msra.mxu0 0
        %1430 = vmatprep.subr.bf16.mxu0 0
        %1431 = vmatpush2.bf16.xpose.msra.mxu0 0
        %1432 = vmatprep.subr.bf16.mxu0 0
        %1433 = vmatpush2.bf16.xpose.msra.mxu0 0
        %1434 = vmatprep.subr.bf16.mxu0 0
        %1435 = vmatpush2.bf16.xpose.msra.mxu0 0
        %1436 = vmatprep.mubr.bf16.mxu0 0
        %1437 = vmatmul.mubr.bf16.gmra.mxu0 %v1399
        %v1438 = vpop.f32.mrf.mxu0
        %v1439 = vadd.f32 0.0, %v1438
        %v1440 = vpop.f32.mrf.mxu0
        %v1441 = vpop.f32.mrf.mxu0
        %v1442 = vpop.f32.mrf.mxu0
        %1443 = vdwg.mxu0
        %v1445 = vsel %vm1351, %v1047, 0
        %v1448 = vsel %vm1351, %v1197, 0
        %1450 = vmatprep.subr.bf16.mxu0 0
        %1451 = vmatpush1.bf16.xpose.msra.mxu0 0
        %1452 = vmatprep.subr.bf16.mxu0 0
        %1453 = vmatpush1.bf16.xpose.msra.mxu0 0
        %1454 = vmatprep.subr.bf16.mxu0 0
        %1455 = vmatpush1.bf16.xpose.msra.mxu0 0
        %1456 = vmatprep.subr.bf16.mxu0 0
        %1457 = vmatpush1.bf16.xpose.msra.mxu0 0
        %1458 = vmatprep.subr.bf16.mxu0 0
        %1459 = vmatpush1.bf16.xpose.msra.mxu0 0
        %1460 = vmatprep.subr.bf16.mxu0 0
        %1461 = vmatpush1.bf16.xpose.msra.mxu0 0
        %1462 = vmatprep.subr.bf16.mxu0 0
        %1463 = vmatpush1.bf16.xpose.msra.mxu0 0
        %1464 = vmatprep.subr.bf16.mxu0 0
        %1465 = vmatpush1.bf16.xpose.msra.mxu0 %v1448
        %1466 = vmatprep.subr.bf16.mxu0 0
        %1467 = vmatpush2.bf16.xpose.msra.mxu0 0
        %1468 = vmatprep.subr.bf16.mxu0 0
        %1469 = vmatpush2.bf16.xpose.msra.mxu0 0
        %1470 = vmatprep.subr.bf16.mxu0 0
        %1471 = vmatpush2.bf16.xpose.msra.mxu0 0
        %1472 = vmatprep.subr.bf16.mxu0 0
        %1473 = vmatpush2.bf16.xpose.msra.mxu0 0
        %1474 = vmatprep.subr.bf16.mxu0 0
        %1475 = vmatpush2.bf16.xpose.msra.mxu0 0
        %1476 = vmatprep.subr.bf16.mxu0 0
        %1477 = vmatpush2.bf16.xpose.msra.mxu0 0
        %1478 = vmatprep.subr.bf16.mxu0 0
        %1479 = vmatpush2.bf16.xpose.msra.mxu0 0
        %1480 = vmatprep.subr.bf16.mxu0 0
        %1481 = vmatpush2.bf16.xpose.msra.mxu0 0
        %1482 = vmatprep.mubr.bf16.mxu0 0
        %1483 = vmatmul.mubr.bf16.gmra.mxu0 %v1445
        %v1484 = vpop.f32.mrf.mxu0
        %v1485 = vadd.f32 0.0, %v1484
        %v1486 = vpop.f32.mrf.mxu0
        %v1487 = vpop.f32.mrf.mxu0
        %v1488 = vpop.f32.mrf.mxu0
        %1489 = vdwg.mxu0
        %v1491 = vsel %vm1351, %v1050, 0
        %v1494 = vsel %vm1351, %v1200, 0
        %1496 = vmatprep.subr.bf16.mxu0 0
        %1497 = vmatpush1.bf16.xpose.msra.mxu0 0
        %1498 = vmatprep.subr.bf16.mxu0 0
        %1499 = vmatpush1.bf16.xpose.msra.mxu0 0
        %1500 = vmatprep.subr.bf16.mxu0 0
        %1501 = vmatpush1.bf16.xpose.msra.mxu0 0
        %1502 = vmatprep.subr.bf16.mxu0 0
        %1503 = vmatpush1.bf16.xpose.msra.mxu0 0
        %1504 = vmatprep.subr.bf16.mxu0 0
        %1505 = vmatpush1.bf16.xpose.msra.mxu0 0
        %1506 = vmatprep.subr.bf16.mxu0 0
        %1507 = vmatpush1.bf16.xpose.msra.mxu0 0
        %1508 = vmatprep.subr.bf16.mxu0 0
        %1509 = vmatpush1.bf16.xpose.msra.mxu0 0
        %1510 = vmatprep.subr.bf16.mxu0 0
        %1511 = vmatpush1.bf16.xpose.msra.mxu0 %v1494
        %1512 = vmatprep.subr.bf16.mxu0 0
        %1513 = vmatpush2.bf16.xpose.msra.mxu0 0
        %1514 = vmatprep.subr.bf16.mxu0 0
        %1515 = vmatpush2.bf16.xpose.msra.mxu0 0
        %1516 = vmatprep.subr.bf16.mxu0 0
        %1517 = vmatpush2.bf16.xpose.msra.mxu0 0
        %1518 = vmatprep.subr.bf16.mxu0 0
        %1519 = vmatpush2.bf16.xpose.msra.mxu0 0
        %1520 = vmatprep.subr.bf16.mxu0 0
        %1521 = vmatpush2.bf16.xpose.msra.mxu0 0
        %1522 = vmatprep.subr.bf16.mxu0 0
        %1523 = vmatpush2.bf16.xpose.msra.mxu0 0
        %1524 = vmatprep.subr.bf16.mxu0 0
        %1525 = vmatpush2.bf16.xpose.msra.mxu0 0
        %1526 = vmatprep.subr.bf16.mxu0 0
        %1527 = vmatpush2.bf16.xpose.msra.mxu0 0
        %1528 = vmatprep.mubr.bf16.mxu0 0
        %1529 = vmatmul.mubr.bf16.gmra.mxu0 %v1491
        %v1530 = vpop.f32.mrf.mxu0
        %v1531 = vadd.f32 0.0, %v1530
        %v1532 = vpop.f32.mrf.mxu0
        %v1533 = vpop.f32.mrf.mxu0
        %v1534 = vpop.f32.mrf.mxu0
        %1535 = vdwg.mxu0
        %v1536 = vsel %vm1351, %v1393, -inf
        %1537 = vmax.xlane.f32.xlu0 %v1536
        %v1538 = vpop.xlane.xlu0 %1537
        %v1539 = vsel %vm1351, %v1439, -inf
        %1540 = vmax.xlane.f32.xlu0 %v1539
        %v1541 = vpop.xlane.xlu0 %1540
        %v1542 = vsel %vm1351, %v1485, -inf
        %1543 = vmax.xlane.f32.xlu0 %v1542
        %v1544 = vpop.xlane.xlu0 %1543
        %v1545 = vsel %vm1351, %v1531, -inf
        %1546 = vmax.xlane.f32.xlu0 %v1545
        %v1547 = vpop.xlane.xlu0 %1546
        %v1548 = vsub.f32 %v1393, %v1538
        %v1549 = vsub.f32 %v1439, %v1541
        %v1550 = vsub.f32 %v1485, %v1544
        %v1551 = vsub.f32 %v1531, %v1547
        %v1552 = vmul.f32 %v1548, 1.442695
        %v1553 = vpow.pop %v1552
        %v1554 = vmul.f32 %v1549, 1.442695
        %v1555 = vpow.pop %v1554
        %v1556 = vmul.f32 %v1550, 1.442695
        %v1557 = vpow.pop %v1556
        %v1558 = vmul.f32 %v1551, 1.442695
        %v1559 = vpow.pop %v1558
        %v1560 = vsel %vm1351, %v1553, 0.0
        %1561 = vadd.xlane.f32.xlu0 %v1560
        %v1562 = vpop.xlane.xlu0 %1561
        %v1563 = vsel %vm1351, %v1555, 0.0
        %1564 = vadd.xlane.f32.xlu0 %v1563
        %v1565 = vpop.xlane.xlu0 %1564
        %v1566 = vsel %vm1351, %v1557, 0.0
        %1567 = vadd.xlane.f32.xlu0 %v1566
        %v1568 = vpop.xlane.xlu0 %1567
        %v1569 = vsel %vm1351, %v1559, 0.0
        %1570 = vadd.xlane.f32.xlu0 %v1569
        %v1571 = vpop.xlane.xlu0 %1570
        %v1572 = vrcp.pop %v1562
        %v1573 = vrcp.pop %v1565
        %v1574 = vrcp.pop %v1568
        %v1575 = vrcp.pop %v1571
        %v1576 = vmul.f32 %v1553, %v1572
        %v1577 = vmul.f32 %v1555, %v1573
        %v1578 = vmul.f32 %v1557, %v1574
        %v1579 = vmul.f32 %v1559, %v1575
        %v1580 = vpack.c.bf16 %v1576, %v1576
        %v1581 = vpack.c.bf16 %v1577, %v1577
        %v1582 = vpack.c.bf16 %v1578, %v1578
        %v1583 = vpack.c.bf16 %v1579, %v1579
        %vm1584 = vcmask 60416
        %1585 = vst.msk [vmem:[%s664] sm:$0xf] %vm1584, %v1580
        %1586 = vst.msk [vmem:[%s664 + $0x4] sm:$0xf] %vm1584, %v1581
        %1587 = vst.msk [vmem:[%s664 + $0x8] sm:$0xf] %vm1584, %v1582
        %1588 = vst.msk [vmem:[%s664 + $0xc] sm:$0xf] %vm1584, %v1583
        %v1590 = vsel %vm1351, %v1580, 0
        %vm1592 = vcmask 1043456
        %v1594 = vsel %vm1592, %v1341, 0
        %1596 = vmatprep.subr.bf16.mxu0 0
        %1597 = vmatpush1.bf16.msra.mxu0 0
        %1598 = vmatprep.subr.bf16.mxu0 0
        %1599 = vmatpush1.bf16.msra.mxu0 0
        %1600 = vmatprep.subr.bf16.mxu0 0
        %1601 = vmatpush1.bf16.msra.mxu0 0
        %1602 = vmatprep.subr.bf16.mxu0 0
        %1603 = vmatpush1.bf16.msra.mxu0 0
        %1604 = vmatprep.subr.bf16.mxu0 0
        %1605 = vmatpush1.bf16.msra.mxu0 0
        %1606 = vmatprep.subr.bf16.mxu0 0
        %1607 = vmatpush1.bf16.msra.mxu0 0
        %1608 = vmatprep.subr.bf16.mxu0 0
        %1609 = vmatpush1.bf16.msra.mxu0 0
        %1610 = vmatprep.subr.bf16.mxu0 0
        %1611 = vmatpush1.bf16.msra.mxu0 %v1594
        %1612 = vmatprep.subr.bf16.mxu0 0
        %1613 = vmatpush2.bf16.msra.mxu0 0
        %1614 = vmatprep.subr.bf16.mxu0 0
        %1615 = vmatpush2.bf16.msra.mxu0 0
        %1616 = vmatprep.subr.bf16.mxu0 0
        %1617 = vmatpush2.bf16.msra.mxu0 0
        %1618 = vmatprep.subr.bf16.mxu0 0
        %1619 = vmatpush2.bf16.msra.mxu0 0
        %1620 = vmatprep.subr.bf16.mxu0 0
        %1621 = vmatpush2.bf16.msra.mxu0 0
        %1622 = vmatprep.subr.bf16.mxu0 0
        %1623 = vmatpush2.bf16.msra.mxu0 0
        %1624 = vmatprep.subr.bf16.mxu0 0
        %1625 = vmatpush2.bf16.msra.mxu0 0
        %1626 = vmatprep.subr.bf16.mxu0 0
        %1627 = vmatpush2.bf16.msra.mxu0 0
        %1628 = vmatprep.mubr.bf16.mxu0 0
        %1629 = vmatmul.mubr.bf16.gmra.mxu0 %v1590
        %v1630 = vpop.f32.mrf.mxu0
        %v1631 = vadd.f32 0.0, %v1630
        %v1632 = vpop.f32.mrf.mxu0
        %v1633 = vpop.f32.mrf.mxu0
        %v1634 = vpop.f32.mrf.mxu0
        %1635 = vdwg.mxu0
        %v1637 = vsel %vm1351, %v1581, 0
        %v1640 = vsel %vm1592, %v1344, 0
        %1642 = vmatprep.subr.bf16.mxu0 0
        %1643 = vmatpush1.bf16.msra.mxu0 0
        %1644 = vmatprep.subr.bf16.mxu0 0
        %1645 = vmatpush1.bf16.msra.mxu0 0
        %1646 = vmatprep.subr.bf16.mxu0 0
        %1647 = vmatpush1.bf16.msra.mxu0 0
        %1648 = vmatprep.subr.bf16.mxu0 0
        %1649 = vmatpush1.bf16.msra.mxu0 0
        %1650 = vmatprep.subr.bf16.mxu0 0
        %1651 = vmatpush1.bf16.msra.mxu0 0
        %1652 = vmatprep.subr.bf16.mxu0 0
        %1653 = vmatpush1.bf16.msra.mxu0 0
        %1654 = vmatprep.subr.bf16.mxu0 0
        %1655 = vmatpush1.bf16.msra.mxu0 0
        %1656 = vmatprep.subr.bf16.mxu0 0
        %1657 = vmatpush1.bf16.msra.mxu0 %v1640
        %1658 = vmatprep.subr.bf16.mxu0 0
        %1659 = vmatpush2.bf16.msra.mxu0 0
        %1660 = vmatprep.subr.bf16.mxu0 0
        %1661 = vmatpush2.bf16.msra.mxu0 0
        %1662 = vmatprep.subr.bf16.mxu0 0
        %1663 = vmatpush2.bf16.msra.mxu0 0
        %1664 = vmatprep.subr.bf16.mxu0 0
        %1665 = vmatpush2.bf16.msra.mxu0 0
        %1666 = vmatprep.subr.bf16.mxu0 0
        %1667 = vmatpush2.bf16.msra.mxu0 0
        %1668 = vmatprep.subr.bf16.mxu0 0
        %1669 = vmatpush2.bf16.msra.mxu0 0
        %1670 = vmatprep.subr.bf16.mxu0 0
        %1671 = vmatpush2.bf16.msra.mxu0 0
        %1672 = vmatprep.subr.bf16.mxu0 0
        %1673 = vmatpush2.bf16.msra.mxu0 0
        %1674 = vmatprep.mubr.bf16.mxu0 0
        %1675 = vmatmul.mubr.bf16.gmra.mxu0 %v1637
        %v1676 = vpop.f32.mrf.mxu0
        %v1677 = vadd.f32 0.0, %v1676
        %v1678 = vpop.f32.mrf.mxu0
        %v1679 = vpop.f32.mrf.mxu0
        %v1680 = vpop.f32.mrf.mxu0
        %1681 = vdwg.mxu0
        %v1683 = vsel %vm1351, %v1582, 0
        %v1686 = vsel %vm1592, %v1347, 0
        %1688 = vmatprep.subr.bf16.mxu0 0
        %1689 = vmatpush1.bf16.msra.mxu0 0
        %1690 = vmatprep.subr.bf16.mxu0 0
        %1691 = vmatpush1.bf16.msra.mxu0 0
        %1692 = vmatprep.subr.bf16.mxu0 0
        %1693 = vmatpush1.bf16.msra.mxu0 0
        %1694 = vmatprep.subr.bf16.mxu0 0
        %1695 = vmatpush1.bf16.msra.mxu0 0
        %1696 = vmatprep.subr.bf16.mxu0 0
        %1697 = vmatpush1.bf16.msra.mxu0 0
        %1698 = vmatprep.subr.bf16.mxu0 0
        %1699 = vmatpush1.bf16.msra.mxu0 0
        %1700 = vmatprep.subr.bf16.mxu0 0
        %1701 = vmatpush1.bf16.msra.mxu0 0
        %1702 = vmatprep.subr.bf16.mxu0 0
        %1703 = vmatpush1.bf16.msra.mxu0 %v1686
        %1704 = vmatprep.subr.bf16.mxu0 0
        %1705 = vmatpush2.bf16.msra.mxu0 0
        %1706 = vmatprep.subr.bf16.mxu0 0
        %1707 = vmatpush2.bf16.msra.mxu0 0
        %1708 = vmatprep.subr.bf16.mxu0 0
        %1709 = vmatpush2.bf16.msra.mxu0 0
        %1710 = vmatprep.subr.bf16.mxu0 0
        %1711 = vmatpush2.bf16.msra.mxu0 0
        %1712 = vmatprep.subr.bf16.mxu0 0
        %1713 = vmatpush2.bf16.msra.mxu0 0
        %1714 = vmatprep.subr.bf16.mxu0 0
        %1715 = vmatpush2.bf16.msra.mxu0 0
        %1716 = vmatprep.subr.bf16.mxu0 0
        %1717 = vmatpush2.bf16.msra.mxu0 0
        %1718 = vmatprep.subr.bf16.mxu0 0
        %1719 = vmatpush2.bf16.msra.mxu0 0
        %1720 = vmatprep.mubr.bf16.mxu0 0
        %1721 = vmatmul.mubr.bf16.gmra.mxu0 %v1683
        %v1722 = vpop.f32.mrf.mxu0
        %v1723 = vadd.f32 0.0, %v1722
        %v1724 = vpop.f32.mrf.mxu0
        %v1725 = vpop.f32.mrf.mxu0
        %v1726 = vpop.f32.mrf.mxu0
        %1727 = vdwg.mxu0
        %v1729 = vsel %vm1351, %v1583, 0
        %v1732 = vsel %vm1592, %v1350, 0
        %1734 = vmatprep.subr.bf16.mxu0 0
        %1735 = vmatpush1.bf16.msra.mxu0 0
        %1736 = vmatprep.subr.bf16.mxu0 0
        %1737 = vmatpush1.bf16.msra.mxu0 0
        %1738 = vmatprep.subr.bf16.mxu0 0
        %1739 = vmatpush1.bf16.msra.mxu0 0
        %1740 = vmatprep.subr.bf16.mxu0 0
        %1741 = vmatpush1.bf16.msra.mxu0 0
        %1742 = vmatprep.subr.bf16.mxu0 0
        %1743 = vmatpush1.bf16.msra.mxu0 0
        %1744 = vmatprep.subr.bf16.mxu0 0
        %1745 = vmatpush1.bf16.msra.mxu0 0
        %1746 = vmatprep.subr.bf16.mxu0 0
        %1747 = vmatpush1.bf16.msra.mxu0 0
        %1748 = vmatprep.subr.bf16.mxu0 0
        %1749 = vmatpush1.bf16.msra.mxu0 %v1732
        %1750 = vmatprep.subr.bf16.mxu0 0
        %1751 = vmatpush2.bf16.msra.mxu0 0
        %1752 = vmatprep.subr.bf16.mxu0 0
        %1753 = vmatpush2.bf16.msra.mxu0 0
        %1754 = vmatprep.subr.bf16.mxu0 0
        %1755 = vmatpush2.bf16.msra.mxu0 0
        %1756 = vmatprep.subr.bf16.mxu0 0
        %1757 = vmatpush2.bf16.msra.mxu0 0
        %1758 = vmatprep.subr.bf16.mxu0 0
        %1759 = vmatpush2.bf16.msra.mxu0 0
        %1760 = vmatprep.subr.bf16.mxu0 0
        %1761 = vmatpush2.bf16.msra.mxu0 0
        %1762 = vmatprep.subr.bf16.mxu0 0
        %1763 = vmatpush2.bf16.msra.mxu0 0
        %1764 = vmatprep.subr.bf16.mxu0 0
        %1765 = vmatpush2.bf16.msra.mxu0 0
        %1766 = vmatprep.mubr.bf16.mxu0 0
        %1767 = vmatmul.mubr.bf16.gmra.mxu0 %v1729
        %v1768 = vpop.f32.mrf.mxu0
        %v1769 = vadd.f32 0.0, %v1768
        %v1770 = vpop.f32.mrf.mxu0
        %v1771 = vpop.f32.mrf.mxu0
        %v1772 = vpop.f32.mrf.mxu0
        %1773 = vdwg.mxu0
        %v1774 = vcombine.low %v1631, %v1723
        %v1775 = vcombine.high %v1631, %v1723
        %v1777 = vunpack.c.l.s4 1983009808
        %v1778 = vunpack.c.0.s8 %v1777
        %v1779 = vlaneseq
        %v1780 = vshrl.u32 %v1779, 7
        %v1781 = vsub.s32 %v1778, %v1780
        %v1782 = vrot.slane %v1774, %v1781
        %v1784 = vunpack.c.l.s4 1983009808
        %v1785 = vunpack.c.0.s8 %v1784
        %v1786 = vlaneseq
        %v1787 = vshrl.u32 %v1786, 7
        %v1788 = vsub.s32 %v1785, %v1787
        %v1789 = vrot.slane %v1775, %v1788
        %v1790 = vcombine.low %v1677, %v1769
        %v1791 = vcombine.high %v1677, %v1769
        %v1793 = vunpack.c.l.s4 1983009808
        %v1794 = vunpack.c.0.s8 %v1793
        %v1795 = vlaneseq
        %v1796 = vshrl.u32 %v1795, 7
        %v1797 = vsub.s32 %v1794, %v1796
        %v1798 = vrot.slane %v1790, %v1797
        %v1800 = vunpack.c.l.s4 1983009808
        %v1801 = vunpack.c.0.s8 %v1800
        %v1802 = vlaneseq
        %v1803 = vshrl.u32 %v1802, 7
        %v1804 = vsub.s32 %v1801, %v1803
        %v1805 = vrot.slane %v1791, %v1804
        %v1806 = vcombine.low %v1782, %v1798
        %v1807 = vcombine.high %v1782, %v1798
        %v1809 = vunpack.c.l.s4 1934713408
        %v1810 = vunpack.c.0.s8 %v1809
        %v1811 = vlaneseq
        %v1812 = vshrl.u32 %v1811, 7
        %v1813 = vsub.s32 %v1810, %v1812
        %v1814 = vrot.slane %v1806, %v1813
        %v1816 = vunpack.c.l.s4 1934713408
        %v1817 = vunpack.c.0.s8 %v1816
        %v1818 = vlaneseq
        %v1819 = vshrl.u32 %v1818, 7
        %v1820 = vsub.s32 %v1817, %v1819
        %v1821 = vrot.slane %v1807, %v1820
        %v1822 = vcombine.low %v1789, %v1805
        %v1823 = vcombine.high %v1789, %v1805
        %v1825 = vunpack.c.l.s4 1934713408
        %v1826 = vunpack.c.0.s8 %v1825
        %v1827 = vlaneseq
        %v1828 = vshrl.u32 %v1827, 7
        %v1829 = vsub.s32 %v1826, %v1828
        %v1830 = vrot.slane %v1822, %v1829
        %v1832 = vunpack.c.l.s4 1934713408
        %v1833 = vunpack.c.0.s8 %v1832
        %v1834 = vlaneseq
        %v1835 = vshrl.u32 %v1834, 7
        %v1836 = vsub.s32 %v1833, %v1835
        %v1837 = vrot.slane %v1823, %v1836
        %v1838 = vcombine.high %v1814, 0.0
        %v1839 = vcombine.high %v1821, 0.0
        %v1840 = vcombine.high %v1830, 0.0
        %v1841 = vcombine.high %v1837, 0.0
        %v1842 = vcombine.low %v1814, %v1821
        %v1844 = vunpack.c.l.s4 1983009808
        %v1845 = vunpack.c.0.s8 %v1844
        %v1846 = vlaneseq
        %v1847 = vshrl.u32 %v1846, 7
        %v1848 = vsub.s32 %v1845, %v1847
        %v1849 = vrot.slane %v1842, %v1848
        %v1850 = vcombine.low %v1838, %v1839
        %v1852 = vunpack.c.l.s4 1983009808
        %v1853 = vunpack.c.0.s8 %v1852
        %v1854 = vlaneseq
        %v1855 = vshrl.u32 %v1854, 7
        %v1856 = vsub.s32 %v1853, %v1855
        %v1857 = vrot.slane %v1850, %v1856
        %v1858 = vcombine.low %v1830, %v1837
        %v1860 = vunpack.c.l.s4 1983009808
        %v1861 = vunpack.c.0.s8 %v1860
        %v1862 = vlaneseq
        %v1863 = vshrl.u32 %v1862, 7
        %v1864 = vsub.s32 %v1861, %v1863
        %v1865 = vrot.slane %v1858, %v1864
        %v1866 = vcombine.low %v1840, %v1841
        %v1868 = vunpack.c.l.s4 1983009808
        %v1869 = vunpack.c.0.s8 %v1868
        %v1870 = vlaneseq
        %v1871 = vshrl.u32 %v1870, 7
        %v1872 = vsub.s32 %v1869, %v1871
        %v1873 = vrot.slane %v1866, %v1872
        %v1874 = vcombine.low %v1849, %v1857
        %v1875 = vcombine.high %v1849, %v1857
        %v1877 = vunpack.c.l.s4 1934713408
        %v1878 = vunpack.c.0.s8 %v1877
        %v1879 = vlaneseq
        %v1880 = vshrl.u32 %v1879, 7
        %v1881 = vsub.s32 %v1878, %v1880
        %v1882 = vrot.slane %v1874, %v1881
        %v1884 = vunpack.c.l.s4 1934713408
        %v1885 = vunpack.c.0.s8 %v1884
        %v1886 = vlaneseq
        %v1887 = vshrl.u32 %v1886, 7
        %v1888 = vsub.s32 %v1885, %v1887
        %v1889 = vrot.slane %v1875, %v1888
        %v1890 = vcombine.low %v1865, %v1873
        %v1891 = vcombine.high %v1865, %v1873
        %v1893 = vunpack.c.l.s4 1934713408
        %v1894 = vunpack.c.0.s8 %v1893
        %v1895 = vlaneseq
        %v1896 = vshrl.u32 %v1895, 7
        %v1897 = vsub.s32 %v1894, %v1896
        %v1898 = vrot.slane %v1890, %v1897
        %v1900 = vunpack.c.l.s4 1934713408
        %v1901 = vunpack.c.0.s8 %v1900
        %v1902 = vlaneseq
        %v1903 = vshrl.u32 %v1902, 7
        %v1904 = vsub.s32 %v1901, %v1903
        %v1905 = vrot.slane %v1891, %v1904
        %v1906 = vcombine.low %v1882, %v1898
        %v1907 = vcombine.high %v1882, %v1898
        %v1908 = vcombine.low %v1889, %v1905
        %v1909 = vcombine.high %v1889, %v1905
        %1911 = vrot.lane.b32.xlu0 %v1907, 8
        %v1912 = vpop.permute.xlu0 %1911
        %1915 = vrot.lane.b32.xlu0 %v1908, 16
        %v1916 = vpop.permute.xlu0 %1915
        %1919 = vrot.lane.b32.xlu0 %v1909, 24
        %v1920 = vpop.permute.xlu0 %1919
        %v1922 = vsel %vm1351, %v1906, %v1912
        %vm1923 = vcmask 130048
        %v1924 = vsel %vm1923, %v1922, %v1916
        %vm1925 = vcmask 195584
        %v1926 = vsel %vm1925, %v1924, %v1920
        %v1927 = vpack.c.bf16 %v1926, %v1926
        %v1928 = vld [vmem:[%s9] sm:$0xf]
        %v1929 = vld [vmem:[%s9 + $0x4] sm:$0xf]
        %v1930 = vld [vmem:[%s9 + $0x8] sm:$0xf]
        %v1931 = vld [vmem:[%s9 + $0xc] sm:$0xf]
        %v1932 = vld [vmem:[%s10] sm:$0x1]
        %v1934 = vlaneseq
        %v1935 = vshrl.u32 %v1934, 7
        %v1936 = vsub.s32 0, %v1935
        %v1937 = vrot.slane %v1932, %v1936
        %v1943 = vunpack.c.l.b16 %v1928
        %v1944 = vunpack.c.l.b16 %v1929
        %v1945 = vunpack.c.l.b16 %v1930
        %v1946 = vunpack.c.l.b16 %v1931
        %v1947 = vpack.c.b16 %v1944, %v1943
        %v1948 = vpack.c.b16 %v1946, %v1945
        %v1952 = vsel %vm837, %v1927, 0
        %1954 = vmatprep.subr.bf16.mxu0 0
        %1955 = vmatpush1.bf16.msra.mxu0 0
        %1956 = vmatprep.subr.bf16.mxu0 0
        %1957 = vmatpush1.bf16.msra.mxu0 0
        %1958 = vmatprep.subr.bf16.mxu0 0
        %1959 = vmatpush1.bf16.msra.mxu0 0
        %1960 = vmatprep.subr.bf16.mxu0 0
        %1961 = vmatpush1.bf16.msra.mxu0 0
        %1962 = vmatprep.subr.bf16.mxu0 0
        %1963 = vmatpush1.bf16.msra.mxu0 0
        %1964 = vmatprep.subr.bf16.mxu0 0
        %1965 = vmatpush1.bf16.msra.mxu0 0
        %1966 = vmatprep.subr.bf16.mxu0 0
        %1967 = vmatpush1.bf16.msra.mxu0 %v1948
        %1968 = vmatprep.subr.bf16.mxu0 0
        %1969 = vmatpush1.bf16.msra.mxu0 %v1947
        %1970 = vmatprep.subr.bf16.mxu0 0
        %1971 = vmatpush2.bf16.msra.mxu0 0
        %1972 = vmatprep.subr.bf16.mxu0 0
        %1973 = vmatpush2.bf16.msra.mxu0 0
        %1974 = vmatprep.subr.bf16.mxu0 0
        %1975 = vmatpush2.bf16.msra.mxu0 0
        %1976 = vmatprep.subr.bf16.mxu0 0
        %1977 = vmatpush2.bf16.msra.mxu0 0
        %1978 = vmatprep.subr.bf16.mxu0 0
        %1979 = vmatpush2.bf16.msra.mxu0 0
        %1980 = vmatprep.subr.bf16.mxu0 0
        %1981 = vmatpush2.bf16.msra.mxu0 0
        %1982 = vmatprep.subr.bf16.mxu0 0
        %1983 = vmatpush2.bf16.msra.mxu0 0
        %1984 = vmatprep.subr.bf16.mxu0 0
        %1985 = vmatpush2.bf16.msra.mxu0 0
        %1986 = vmatprep.mubr.bf16.mxu0 0
        %1987 = vmatmul.mubr.bf16.gmra.mxu0 %v1952
        %v1988 = vpop.f32.mrf.mxu0
        %v1989 = vadd.f32 %v1937, %v1988
        %v1990 = vpop.f32.mrf.mxu0
        %v1991 = vpop.f32.mrf.mxu0
        %v1992 = vpop.f32.mrf.mxu0
        %1993 = vdwg.mxu0
        %v1994 = vadd.f32 %v1989, %v666
        %v1995 = vsel %vm837, %v1994, 0.0
        %1996 = vadd.xlane.f32.xlu0 %v1995
        %v1997 = vpop.xlane.xlu0 %1996
        %v1998 = vrcp.pop 32.0
        %v1999 = vmul.f32 %v1997, %v1998
        %v2000 = vsub.f32 %v1994, %v1999
        %v2001 = vmul.f32 %v2000, %v2000
        %v2002 = vsel %vm837, %v2001, 0.0
        %2003 = vadd.xlane.f32.xlu0 %v2002
        %v2004 = vpop.xlane.xlu0 %2003
        %v2005 = vmul.f32 %v2004, %v1998
        %v2006 = vadd.f32 %v2005, 1e-05
        %v2007 = vrsqrt.pop %v2006
        %v2008 = vmul.f32 %v2000, %v2007
        %v2009 = vld [vmem:[%s11] sm:$0x1]
        %v2011 = vlaneseq
        %v2012 = vshrl.u32 %v2011, 7
        %v2013 = vsub.s32 0, %v2012
        %v2014 = vrot.slane %v2009, %v2013
        %v2016 = vmul.f32 %v2008, %v2014
        %v2017 = vld [vmem:[%s12] sm:$0x1]
        %v2019 = vlaneseq
        %v2020 = vshrl.u32 %v2019, 7
        %v2021 = vsub.s32 0, %v2020
        %v2022 = vrot.slane %v2017, %v2021
        %v2024 = vadd.f32 %v2016, %v2022
        %2025 = vst.msk [vmem:[%s657] sm:$0xff] %vm837, %v2024
        %s2026 = sand.u32 %s353, 1
        %s2027 = scalar_lea.sflag [#allocation6], %s2026
        %s2028 = sand.u32 %s353, 1
        %s2029 = smul.addr %s2028, 8
        %s2030 = scalar_lea.vmem [#allocation19], %s2029
        %s2031 = sand.u32 %s381, 1
        %s2032 = scalar_lea.sflag [#allocation21], %s2031
        %s2033 = sand.u32 %s381, 1
        %s2034 = smul.addr %s2033, 16
        %s2035 = scalar_lea.vmem [#allocation20], %s2034
        // Predicated region
        $region113: #{tpu_custom_call.1} parent=71 // pred_check
          %p2036 = pneg %p363
        $region114: #{tpu_custom_call.1} parent=71 // pred_check_branch
          %2038 = sbr.rel (%p2036) target = $region116
        $region115: #{tpu_custom_call.1} parent=71 // pred_region
          %s2040 = ssub.s32 128, 128
          %2041 = vsyncadd %s2027, %s2040
          %s2042 = sadd.s32 %s46, %s45
          %s2043 = smul.addr %s2042, 128
          %s2044 = scalar_lea.hbm %s13, %s2043
          %s2046 = sshll.u32 %s2030, 4
          %s2047 = int_to_ptr.vmem [resolvable:$true] %s2046
          %2049 = dma.vmem_to_hbm [thread:$0]  %s2047, 128, %s2044, %s2027
        $region116: #{tpu_custom_call.1} parent=71 // pred_fallthru
          _
        // Predicated region
        $region117: #{tpu_custom_call.1} parent=71 // pred_check
          %p2050 = pneg %p391
        $region118: #{tpu_custom_call.1} parent=71 // pred_check_branch
          %2052 = sbr.rel (%p2050) target = $region120
        $region119: #{tpu_custom_call.1} parent=71 // pred_region
          %s2054 = ssub.s32 256, 256
          %2055 = vsyncadd %s2032, %s2054
          %s2056 = smul.addr %s45, 4
          %s2057 = sadd.s32 %s46, %s2056
          %s2058 = smul.addr %s2057, 64
          %s2059 = scalar_lea.hbm %s14, %s2058
          %s2060 = sshll.u32 %s2035, 4
          %s2061 = int_to_ptr.vmem [resolvable:$true] %s2060
          %2066 = dma.vmem_to_hbm [thread:$0]  %s2061, 256, %s2059, %s2032, 64, 64, 4
        $region120: #{tpu_custom_call.1} parent=71 // pred_fallthru
          _
      $region72: #{tpu_custom_call.1} parent=5 // pred_fallthru
        _
      %p2067 = scmp.le.s32.totalorder 2, %s36
      // Predicated region
      $region121: #{tpu_custom_call.1} parent=5 // pred_check
        %p2068 = pneg %p2067
      $region122: #{tpu_custom_call.1} parent=5 // pred_check_branch
        %2070 = sbr.rel (%p2068) target = $region124
      $region123: #{tpu_custom_call.1} parent=5 // pred_region
        %s2071 = ssub.s32 %s36, 2
        // Predicated region
        $region125: #{tpu_custom_call.1} parent=123 // pred_check
          %p2072 = pneg %p369
        $region126: #{tpu_custom_call.1} parent=123 // pred_check_branch
          %2074 = sbr.rel (%p2072) target = $region128
        $region127: #{tpu_custom_call.1} parent=123 // pred_region
          %s2075 = sand.u32 %s354, 1
          %s2076 = scalar_lea.sflag [#allocation6], %s2075
          %s2077 = sand.u32 %s354, 1
          %s2078 = smul.addr %s2077, 8
          %s2079 = scalar_lea.vmem [#allocation19], %s2078
          %2080 = dma.done %s2076, 128
        $region128: #{tpu_custom_call.1} parent=123 // pred_fallthru
          _
        // Predicated region
        $region129: #{tpu_custom_call.1} parent=123 // pred_check
          %p2081 = pneg %p397
        $region130: #{tpu_custom_call.1} parent=123 // pred_check_branch
          %2083 = sbr.rel (%p2081) target = $region132
        $region131: #{tpu_custom_call.1} parent=123 // pred_region
          %s2084 = sand.u32 %s382, 1
          %s2085 = scalar_lea.sflag [#allocation21], %s2084
          %s2086 = sand.u32 %s382, 1
          %s2087 = smul.addr %s2086, 16
          %s2088 = scalar_lea.vmem [#allocation20], %s2087
          %2089 = dma.done %s2085, 256
        $region132: #{tpu_custom_call.1} parent=123 // pred_fallthru
          _
      $region124: #{tpu_custom_call.1} parent=5 // pred_fallthru
        _
    $region6: #{tpu_custom_call.1} parent=1 // loop_footer
      %s40 = sadd.s32 1, %s36
    $region7: #{tpu_custom_call.1} parent=1 // loop_footer_branch
      %35 = sbr.rel target = $region3
    $region8: #{tpu_custom_call.1} parent=1 // loop_exit
      _
    %2090 = vsyncpa [#allocation5], 1
    %s2091 = scalar_lea.sflag [#allocation5], 1
    %2092 = vsyncpa %s2091, 1
    %2093 = vsyncpa [#allocation8], 1
    %s2094 = scalar_lea.sflag [#allocation8], 1
    %2095 = vsyncpa %s2094, 1
    %2096 = vsyncpa [#allocation11], 1
    %2097 = vsyncpa [#allocation14], 1
    %2098 = vsyncpa [#allocation17], 1
    %2099 = vsyncpa [#allocation6], 1
    %s2100 = scalar_lea.sflag [#allocation6], 1
    %2101 = vsyncpa %s2100, 1
    %2102 = vsyncpa [#allocation21], 1
    %s2103 = scalar_lea.sflag [#allocation21], 1
    %2104 = vsyncpa %s2103, 1

</llo_original>
